<compile_context>
chip_gen: v5e
topology: v5e:2x2
jax: 0.10.0
libtpu: 0.0.40
codegen_flags: <defaults>
</compile_context>

<pallas_src>
import functools

import jax
import jax.numpy as jnp
from jax.experimental import pallas as pl
from jax.experimental.pallas import tpu as pltpu

LANE = 128


def _round_up(v, m):
    return ((v + m - 1) // m) * m


def fused_gcn_kernel(a_ref, x_ref, wb_ref, o_ref, *, layer_meta):
    """Whole GCN_C forward on one VMEM-resident block (grid=(1,)).

    layer_meta[l] = (row_off, f_in, f_out, apply_relu) -- compile-time plan
    giving where layer l's [f_in, f_out] weight block and bias row live inside
    the packed wb_ref buffer.
    """
    x = x_ref[...]                                           # [N, f_in0], f32 (tiny)
    for row_off, f_in, f_out, apply_relu in layer_meta:
        w = wb_ref[row_off:row_off + f_in, 0:f_out]                    # [f_in, f_out]
        b = wb_ref[row_off + f_in:row_off + f_in + 1, 0:f_out]         # [1, f_out]
        xw = jnp.dot(x, w, preferred_element_type=jnp.float32) + b
        # Re-read A from VMEM each layer (don't keep a 32+-vreg value live
        # across layers); bf16 MXU operands, f32 accumulation.
        h = jnp.dot(a_ref[...], xw.astype(a_ref.dtype),
                    preferred_element_type=jnp.float32)
        if apply_relu:
            h = jnp.maximum(h, 0.0)
        x = h
    o_ref[...] = x.astype(o_ref.dtype)


def _pack_params(params):
    """Pack all (W, b) into one lane-dense f32 buffer.

    Layout per layer (8-row-aligned blocks, lane-padded width):
        rows [r, r+f_in) : W   (true f_out columns used, remainder zero)
        row   r+f_in     : b
    The last layer's stored f_out is zero-padded to a multiple of 128 so the
    HBM-facing output store is lane-dense; padded columns stay exactly zero
    through bias and the A-matmul, so numerics are unchanged.
    """
    num_layers = len(params)
    lane = _round_up(max(w.shape[1] for w, _ in params), LANE)
    blocks, layer_meta, r = [], [], 0
    for l, (w, b) in enumerate(params):
        f_in, f_out = w.shape
        f_out_store = _round_up(f_out, LANE) if l == num_layers - 1 else f_out
        rows = _round_up(f_in + 1, 8)
        blk = jnp.zeros((rows, lane), jnp.float32)
        blk = blk.at[:f_in, :f_out].set(w.astype(jnp.float32))
        blk = blk.at[f_in, :f_out].set(b.reshape(-1).astype(jnp.float32))
        blocks.append(blk)
        layer_meta.append((r, f_in, f_out_store, l < num_layers - 1))
        r += rows
    return jnp.concatenate(blocks, axis=0), tuple(layer_meta)


def make_gcn_c_forward(params, *, mxu_dtype=jnp.bfloat16, single_buffer=True):
    """Build a jitted eval-mode GCN_C forward: one fused pallas_call per call."""
    wb_packed, layer_meta = _pack_params(params)
    out_actual = params[-1][0].shape[1]
    out_pad = layer_meta[-1][2]
    f_in0 = params[0][0].shape[0]
    max_width = max(m[2] for m in layer_meta)
    a_bytes = jnp.dtype(mxu_dtype).itemsize

    # Generation-aware VMEM budgeting (v7x: 64 MiB physical, v5e/v6e: 128 MiB).
    try:
        vmem_cap = int(getattr(pltpu.get_tpu_info(), "vmem_capacity_bytes",
                               64 * 1024 * 1024))
    except Exception:
        vmem_cap = 64 * 1024 * 1024
    vmem_limit = int(min(vmem_cap * 3 // 4, 96 * 1024 * 1024))

    def resident_spec(shape):
        idx = lambda i: (0,) * len(shape)
        if single_buffer:
            # grid=(1,): nothing to pipeline, don't pay for double buffers.
            return pl.BlockSpec(shape, idx, pipeline_mode=pl.Buffered(1))
        return pl.BlockSpec(shape, idx)

    kernel = functools.partial(fused_gcn_kernel, layer_meta=layer_meta)
    bufs = 1 if single_buffer else 2

    def forward(x, adj):
        n, f_in = x.shape
        assert f_in == f_in0 and adj.shape == (n, n)

        vmem_needed = (
            bufs * n * n * a_bytes                       # A (bf16)
            + bufs * n * f_in0 * 4                       # X
            + bufs * int(wb_packed.size) * 4             # packed params
            + bufs * n * out_pad * 4                     # output
            + 3 * n * max_width * 4                      # live intermediates
        )
        # TODO(synk): row-tiled + K-tiled multi-call fallback (row axis
        # "parallel" -> also uses both v7x TensorCores) for graphs that exceed
        # the fused-path VMEM budget; at SLAPS sizes the fused path always fits.
        assert vmem_needed <= vmem_limit // 2, "graph too large for fused path"

        out_padded = pl.pallas_call(
            kernel,
            out_shape=jax.ShapeDtypeStruct((n, out_pad), jnp.float32),
            grid_spec=pltpu.PrefetchScalarGridSpec(
                num_scalar_prefetch=0,
                grid=(1,),
                in_specs=[
                    resident_spec((n, n)),               # A (bf16, resident)
                    resident_spec((n, f_in0)),           # X
                    resident_spec(wb_packed.shape),      # all W/b, one DMA
                ],
                out_specs=resident_spec((n, out_pad)),
            ),
            compiler_params=pltpu.CompilerParams(
                dimension_semantics=("arbitrary",),
                vmem_limit_bytes=vmem_limit,
            ),
        )(adj.astype(mxu_dtype), x.astype(jnp.float32), wb_packed)
        return out_padded[:, :out_actual]

    return jax.jit(forward)


def init_gcn_c_params(key, in_channels, hidden_channels, out_channels, num_layers):
    """Deterministic init mimicking nn.Linear default (uniform +/- 1/sqrt(fan_in))."""
    dims = [in_channels] + [hidden_channels] * (num_layers - 1) + [out_channels]
    params = []
    for i in range(num_layers):
        f_in, f_out = dims[i], dims[i + 1]
        key, kw, kb = jax.random.split(key, 3)
        bound = 1.0 / (f_in ** 0.5)
        w = jax.random.uniform(kw, (f_in, f_out), jnp.float32, -bound, bound)
        b = jax.random.uniform(kb, (1, f_out), jnp.float32, -bound, bound)
        params.append((w, b))
    return params


def gcn_c_forward_ref(params, x, adj):
    """Pure-JAX f32 reference for validation (eval-mode semantics)."""
    for w, b in params[:-1]:
        x = jnp.maximum(adj @ (x @ w + b), 0.0)
    w, b = params[-1]
    return adj @ (x @ w + b)


if __name__ == "__main__":
    # TODO(synk): training-mode feature + adjacency dropout not implemented
    # (dropout layers are identities in eval mode).
    N = 256              # number of graph nodes
    IN_CH = 16
    HID_CH = 32
    OUT_CH = 8
    NUM_LAYERS = 3

    key = jax.random.PRNGKey(0)
    k_params, k_x, k_adj = jax.random.split(key, 3)

    params = init_gcn_c_params(k_params, IN_CH, HID_CH, OUT_CH, NUM_LAYERS)
    x = jax.random.normal(k_x, (N, IN_CH), jnp.float32)
    # dense "adjacency" (as used by the non-sparse GCNConv path), row-normalized
    adj = jax.random.uniform(k_adj, (N, N), jnp.float32)
    adj = adj / jnp.sum(adj, axis=1, keepdims=True)

    try:
        fwd = make_gcn_c_forward(params, single_buffer=True)
        out = jax.block_until_ready(fwd(x, adj))
    except Exception:
        # Fallback for JAX builds without BlockSpec pipeline_mode support:
        # identical kernel, default (double-buffered) specs.
        fwd = make_gcn_c_forward(params, single_buffer=False)
        out = jax.block_until_ready(fwd(x, adj))

    ref = gcn_c_forward_ref(params, x, adj)
    assert out.shape == (N, OUT_CH)
    # bf16 MXU operands (f32 accumulation): compare at bf16-level tolerance.
    max_err = float(jnp.max(jnp.abs(out - ref)))
    assert max_err < 3e-2, f"max abs error {max_err}"

    print("KERNEL_OK")
</pallas_src>

<mosaic_0001>
module attributes {stable_mosaic.version = 11 : i64} {
  func.func @fused_gcn_kernel(%arg0: i32, %arg1: memref<256x256xbf16, #tpu.memory_space<vmem>>, %arg2: memref<256x16xf32, #tpu.memory_space<vmem>>, %arg3: memref<104x128xf32, #tpu.memory_space<vmem>>, %arg4: memref<256x128xf32, #tpu.memory_space<vmem>>) attributes {dimension_semantics = [#tpu.dimension_semantics<arbitrary>], iteration_bounds = array<i64: 1>, scalar_prefetch = 0 : i64, scratch_operands = 0 : i64, tpu.core_type = #tpu.core_type<tc>, window_params = [{pipeline_mode = #tpu.pipeline_mode<synchronous>, transform_indices = @transform_0, window_bounds = array<i64: 256, 256>}, {pipeline_mode = #tpu.pipeline_mode<synchronous>, transform_indices = @transform_1, window_bounds = array<i64: 256, 16>}, {pipeline_mode = #tpu.pipeline_mode<synchronous>, transform_indices = @transform_2, window_bounds = array<i64: 104, 128>}, {pipeline_mode = #tpu.pipeline_mode<synchronous>, transform_indices = @transform_3, window_bounds = array<i64: 256, 128>}]} {
    %c0 = arith.constant 0 : index
    %c0_0 = arith.constant 0 : index
    %0 = vector.load %arg2[%c0, %c0_0] : memref<256x16xf32, #tpu.memory_space<vmem>>, vector<256x16xf32>
    %c0_1 = arith.constant 0 : index
    %c0_2 = arith.constant 0 : index
    %1 = vector.load %arg3[%c0_1, %c0_2] : memref<104x128xf32, #tpu.memory_space<vmem>>, vector<16x32xf32>
    %c16 = arith.constant 16 : index
    %c0_3 = arith.constant 0 : index
    %2 = vector.load %arg3[%c16, %c0_3] : memref<104x128xf32, #tpu.memory_space<vmem>>, vector<1x32xf32>
    %cst = arith.constant dense<0.000000e+00> : vector<256x32xf32>
    %3 = tpu.matmul %0, %1, %cst {dimension_numbers = #tpu.dot_dimension_numbers<[1], [0], [0], [1], [0, 0, 1, 1], [], []>} : vector<256x16xf32>, vector<16x32xf32>, vector<256x32xf32> -> vector<256x32xf32>
    %4 = vector.broadcast %2 : vector<1x32xf32> to vector<256x32xf32>
    %5 = arith.addf %3, %4 : vector<256x32xf32>
    %c0_4 = arith.constant 0 : index
    %c0_5 = arith.constant 0 : index
    %6 = vector.load %arg1[%c0_4, %c0_5] : memref<256x256xbf16, #tpu.memory_space<vmem>>, vector<256x256xbf16>
    %7 = arith.truncf %5 : vector<256x32xf32> to vector<256x32xbf16>
    %cst_6 = arith.constant dense<0.000000e+00> : vector<256x32xf32>
    %8 = tpu.matmul %6, %7, %cst_6 {dimension_numbers = #tpu.dot_dimension_numbers<[1], [0], [0], [1], [0, 0, 1, 1], [], []>} : vector<256x256xbf16>, vector<256x32xbf16>, vector<256x32xf32> -> vector<256x32xf32>
    %cst_7 = arith.constant 0.000000e+00 : f32
    %9 = vector.broadcast %cst_7 : f32 to vector<256x32xf32>
    %10 = arith.maximumf %8, %9 : vector<256x32xf32>
    %c24 = arith.constant 24 : index
    %c0_8 = arith.constant 0 : index
    %11 = vector.load %arg3[%c24, %c0_8] : memref<104x128xf32, #tpu.memory_space<vmem>>, vector<32x32xf32>
    %c56 = arith.constant 56 : index
    %c0_9 = arith.constant 0 : index
    %12 = vector.load %arg3[%c56, %c0_9] : memref<104x128xf32, #tpu.memory_space<vmem>>, vector<1x32xf32>
    %cst_10 = arith.constant dense<0.000000e+00> : vector<256x32xf32>
    %13 = tpu.matmul %10, %11, %cst_10 {dimension_numbers = #tpu.dot_dimension_numbers<[1], [0], [0], [1], [0, 0, 1, 1], [], []>} : vector<256x32xf32>, vector<32x32xf32>, vector<256x32xf32> -> vector<256x32xf32>
    %14 = vector.broadcast %12 : vector<1x32xf32> to vector<256x32xf32>
    %15 = arith.addf %13, %14 : vector<256x32xf32>
    %c0_11 = arith.constant 0 : index
    %c0_12 = arith.constant 0 : index
    %16 = vector.load %arg1[%c0_11, %c0_12] : memref<256x256xbf16, #tpu.memory_space<vmem>>, vector<256x256xbf16>
    %17 = arith.truncf %15 : vector<256x32xf32> to vector<256x32xbf16>
    %cst_13 = arith.constant dense<0.000000e+00> : vector<256x32xf32>
    %18 = tpu.matmul %16, %17, %cst_13 {dimension_numbers = #tpu.dot_dimension_numbers<[1], [0], [0], [1], [0, 0, 1, 1], [], []>} : vector<256x256xbf16>, vector<256x32xbf16>, vector<256x32xf32> -> vector<256x32xf32>
    %cst_14 = arith.constant 0.000000e+00 : f32
    %19 = vector.broadcast %cst_14 : f32 to vector<256x32xf32>
    %20 = arith.maximumf %18, %19 : vector<256x32xf32>
    %c64 = arith.constant 64 : index
    %c0_15 = arith.constant 0 : index
    %21 = vector.load %arg3[%c64, %c0_15] : memref<104x128xf32, #tpu.memory_space<vmem>>, vector<32x128xf32>
    %c96 = arith.constant 96 : index
    %c0_16 = arith.constant 0 : index
    %22 = vector.load %arg3[%c96, %c0_16] : memref<104x128xf32, #tpu.memory_space<vmem>>, vector<1x128xf32>
    %cst_17 = arith.constant dense<0.000000e+00> : vector<256x128xf32>
    %23 = tpu.matmul %20, %21, %cst_17 {dimension_numbers = #tpu.dot_dimension_numbers<[1], [0], [0], [1], [0, 0, 1, 1], [], []>} : vector<256x32xf32>, vector<32x128xf32>, vector<256x128xf32> -> vector<256x128xf32>
    %24 = vector.broadcast %22 : vector<1x128xf32> to vector<256x128xf32>
    %25 = arith.addf %23, %24 : vector<256x128xf32>
    %c0_18 = arith.constant 0 : index
    %c0_19 = arith.constant 0 : index
    %26 = vector.load %arg1[%c0_18, %c0_19] : memref<256x256xbf16, #tpu.memory_space<vmem>>, vector<256x256xbf16>
    %27 = arith.truncf %25 : vector<256x128xf32> to vector<256x128xbf16>
    %cst_20 = arith.constant dense<0.000000e+00> : vector<256x128xf32>
    %28 = tpu.matmul %26, %27, %cst_20 {dimension_numbers = #tpu.dot_dimension_numbers<[1], [0], [0], [1], [0, 0, 1, 1], [], []>} : vector<256x256xbf16>, vector<256x128xbf16>, vector<256x128xf32> -> vector<256x128xf32>
    %c0_21 = arith.constant 0 : index
    %c0_22 = arith.constant 0 : index
    %29 = vector.load %arg4[%c0_21, %c0_22] : memref<256x128xf32, #tpu.memory_space<vmem>>, vector<256x128xf32>
    tpu.vector_store %arg4[%c0_21, %c0_22], %28 {strides = array<i32>} : memref<256x128xf32, #tpu.memory_space<vmem>>, vector<256x128xf32>,
    return
  }
  func.func @transform_0(%arg0: i32) -> (i32, i32) {
    %c0_i32 = arith.constant 0 : i32
    %c0_i32_0 = arith.constant 0 : i32
    %c0_i32_1 = arith.constant 0 : i32
    return %c0_i32, %c0_i32_0 : i32, i32
  }
  func.func @transform_1(%arg0: i32) -> (i32, i32) {
    %c0_i32 = arith.constant 0 : i32
    %c0_i32_0 = arith.constant 0 : i32
    %c0_i32_1 = arith.constant 0 : i32
    return %c0_i32, %c0_i32_0 : i32, i32
  }
  func.func @transform_2(%arg0: i32) -> (i32, i32) {
    %c0_i32 = arith.constant 0 : i32
    %c0_i32_0 = arith.constant 0 : i32
    %c0_i32_1 = arith.constant 0 : i32
    return %c0_i32, %c0_i32_0 : i32, i32
  }
  func.func @transform_3(%arg0: i32) -> (i32, i32) {
    %c0_i32 = arith.constant 0 : i32
    %c0_i32_0 = arith.constant 0 : i32
    %c0_i32_1 = arith.constant 0 : i32
    return %c0_i32, %c0_i32_0 : i32, i32
  }
}

module attributes {stable_mosaic.version = 11 : i64} {
  func.func @fused_gcn_kernel(%arg0: i32, %arg1: memref<256x256xbf16, #tpu.memory_space<vmem>>, %arg2: memref<256x16xf32, #tpu.memory_space<vmem>>, %arg3: memref<104x128xf32, #tpu.memory_space<vmem>>, %arg4: memref<256x128xf32, #tpu.memory_space<vmem>>) attributes {dimension_semantics = [#tpu.dimension_semantics<arbitrary>], iteration_bounds = array<i64: 1>, scalar_prefetch = 0 : i64, scratch_operands = 0 : i64, tpu.core_type = #tpu.core_type<tc>, window_params = [{pipeline_mode = #tpu.pipeline_mode<synchronous>, transform_indices = @transform_0, window_bounds = array<i64: 256, 256>}, {pipeline_mode = #tpu.pipeline_mode<synchronous>, transform_indices = @transform_1, window_bounds = array<i64: 256, 16>}, {pipeline_mode = #tpu.pipeline_mode<synchronous>, transform_indices = @transform_2, window_bounds = array<i64: 104, 128>}, {pipeline_mode = #tpu.pipeline_mode<synchronous>, transform_indices = @transform_3, window_bounds = array<i64: 256, 128>}]} {
    %c0 = arith.constant 0 : index
    %c0_0 = arith.constant 0 : index
    %0 = vector.load %arg2[%c0, %c0_0] : memref<256x16xf32, #tpu.memory_space<vmem>>, vector<256x16xf32>
    %c0_1 = arith.constant 0 : index
    %c0_2 = arith.constant 0 : index
    %1 = vector.load %arg3[%c0_1, %c0_2] : memref<104x128xf32, #tpu.memory_space<vmem>>, vector<16x32xf32>
    %c16 = arith.constant 16 : index
    %c0_3 = arith.constant 0 : index
    %2 = vector.load %arg3[%c16, %c0_3] : memref<104x128xf32, #tpu.memory_space<vmem>>, vector<1x32xf32>
    %cst = arith.constant dense<0.000000e+00> : vector<256x32xf32>
    %3 = tpu.matmul %0, %1, %cst {dimension_numbers = #tpu.dot_dimension_numbers<[1], [0], [0], [1], [0, 0, 1, 1], [], []>} : vector<256x16xf32>, vector<16x32xf32>, vector<256x32xf32> -> vector<256x32xf32>
    %4 = vector.broadcast %2 : vector<1x32xf32> to vector<256x32xf32>
    %5 = arith.addf %3, %4 : vector<256x32xf32>
    %c0_4 = arith.constant 0 : index
    %c0_5 = arith.constant 0 : index
    %6 = vector.load %arg1[%c0_4, %c0_5] : memref<256x256xbf16, #tpu.memory_space<vmem>>, vector<256x256xbf16>
    %7 = arith.truncf %5 : vector<256x32xf32> to vector<256x32xbf16>
    %cst_6 = arith.constant dense<0.000000e+00> : vector<256x32xf32>
    %8 = tpu.matmul %6, %7, %cst_6 {dimension_numbers = #tpu.dot_dimension_numbers<[1], [0], [0], [1], [0, 0, 1, 1], [], []>} : vector<256x256xbf16>, vector<256x32xbf16>, vector<256x32xf32> -> vector<256x32xf32>
    %cst_7 = arith.constant 0.000000e+00 : f32
    %9 = vector.broadcast %cst_7 : f32 to vector<256x32xf32>
    %10 = arith.maximumf %8, %9 : vector<256x32xf32>
    %c24 = arith.constant 24 : index
    %c0_8 = arith.constant 0 : index
    %11 = vector.load %arg3[%c24, %c0_8] : memref<104x128xf32, #tpu.memory_space<vmem>>, vector<32x32xf32>
    %c56 = arith.constant 56 : index
    %c0_9 = arith.constant 0 : index
    %12 = vector.load %arg3[%c56, %c0_9] : memref<104x128xf32, #tpu.memory_space<vmem>>, vector<1x32xf32>
    %cst_10 = arith.constant dense<0.000000e+00> : vector<256x32xf32>
    %13 = tpu.matmul %10, %11, %cst_10 {dimension_numbers = #tpu.dot_dimension_numbers<[1], [0], [0], [1], [0, 0, 1, 1], [], []>} : vector<256x32xf32>, vector<32x32xf32>, vector<256x32xf32> -> vector<256x32xf32>
    %14 = vector.broadcast %12 : vector<1x32xf32> to vector<256x32xf32>
    %15 = arith.addf %13, %14 : vector<256x32xf32>
    %c0_11 = arith.constant 0 : index
    %c0_12 = arith.constant 0 : index
    %16 = vector.load %arg1[%c0_11, %c0_12] : memref<256x256xbf16, #tpu.memory_space<vmem>>, vector<256x256xbf16>
    %17 = arith.truncf %15 : vector<256x32xf32> to vector<256x32xbf16>
    %cst_13 = arith.constant dense<0.000000e+00> : vector<256x32xf32>
    %18 = tpu.matmul %16, %17, %cst_13 {dimension_numbers = #tpu.dot_dimension_numbers<[1], [0], [0], [1], [0, 0, 1, 1], [], []>} : vector<256x256xbf16>, vector<256x32xbf16>, vector<256x32xf32> -> vector<256x32xf32>
    %cst_14 = arith.constant 0.000000e+00 : f32
    %19 = vector.broadcast %cst_14 : f32 to vector<256x32xf32>
    %20 = arith.maximumf %18, %19 : vector<256x32xf32>
    %c64 = arith.constant 64 : index
    %c0_15 = arith.constant 0 : index
    %21 = vector.load %arg3[%c64, %c0_15] : memref<104x128xf32, #tpu.memory_space<vmem>>, vector<32x128xf32>
    %c96 = arith.constant 96 : index
    %c0_16 = arith.constant 0 : index
    %22 = vector.load %arg3[%c96, %c0_16] : memref<104x128xf32, #tpu.memory_space<vmem>>, vector<1x128xf32>
    %cst_17 = arith.constant dense<0.000000e+00> : vector<256x128xf32>
    %23 = tpu.matmul %20, %21, %cst_17 {dimension_numbers = #tpu.dot_dimension_numbers<[1], [0], [0], [1], [0, 0, 1, 1], [], []>} : vector<256x32xf32>, vector<32x128xf32>, vector<256x128xf32> -> vector<256x128xf32>
    %24 = vector.broadcast %22 : vector<1x128xf32> to vector<256x128xf32>
    %25 = arith.addf %23, %24 : vector<256x128xf32>
    %c0_18 = arith.constant 0 : index
    %c0_19 = arith.constant 0 : index
    %26 = vector.load %arg1[%c0_18, %c0_19] : memref<256x256xbf16, #tpu.memory_space<vmem>>, vector<256x256xbf16>
    %27 = arith.truncf %25 : vector<256x128xf32> to vector<256x128xbf16>
    %cst_20 = arith.constant dense<0.000000e+00> : vector<256x128xf32>
    %28 = tpu.matmul %26, %27, %cst_20 {dimension_numbers = #tpu.dot_dimension_numbers<[1], [0], [0], [1], [0, 0, 1, 1], [], []>} : vector<256x256xbf16>, vector<256x128xbf16>, vector<256x128xf32> -> vector<256x128xf32>
    %c0_21 = arith.constant 0 : index
    %c0_22 = arith.constant 0 : index
    %29 = vector.load %arg4[%c0_21, %c0_22] : memref<256x128xf32, #tpu.memory_space<vmem>>, vector<256x128xf32>
    tpu.vector_store %arg4[%c0_21, %c0_22], %28 {strides = array<i32>} : memref<256x128xf32, #tpu.memory_space<vmem>>, vector<256x128xf32>,
    return
  }
  func.func @transform_0(%arg0: i32) -> (i32, i32) {
    %c0_i32 = arith.constant 0 : i32
    %c0_i32_0 = arith.constant 0 : i32
    %c0_i32_1 = arith.constant 0 : i32
    return %c0_i32, %c0_i32_0 : i32, i32
  }
  func.func @transform_1(%arg0: i32) -> (i32, i32) {
    %c0_i32 = arith.constant 0 : i32
    %c0_i32_0 = arith.constant 0 : i32
    %c0_i32_1 = arith.constant 0 : i32
    return %c0_i32, %c0_i32_0 : i32, i32
  }
  func.func @transform_2(%arg0: i32) -> (i32, i32) {
    %c0_i32 = arith.constant 0 : i32
    %c0_i32_0 = arith.constant 0 : i32
    %c0_i32_1 = arith.constant 0 : i32
    return %c0_i32, %c0_i32_0 : i32, i32
  }
  func.func @transform_3(%arg0: i32) -> (i32, i32) {
    %c0_i32 = arith.constant 0 : i32
    %c0_i32_0 = arith.constant 0 : i32
    %c0_i32_1 = arith.constant 0 : i32
    return %c0_i32, %c0_i32_0 : i32, i32
  }
}

</mosaic_0001>

<llo_original>
// kernel: forward.1
$region0: #{forward.1}
  #allocation0 [shape = 'u32[]', space=smem, size = 0x4, offset = 0x4, fixed_abs, tag = 'smem constant byte address 0x4 - core index']
  #allocation1 [shape = 'u32[72,128]{1,0:T(1,128)}', space=vmem, size = 0x9000, scoped, tag = 'internal scratch']
  %s0 = inlined_call_operand.vmem [shape: bf16[256,256], index: 0, kind: input, shape index: {}]
  %s1 = inlined_call_operand.vmem [shape: f32[256,16], index: 1, kind: input, shape index: {}]
  %s2 = inlined_call_operand.vmem [shape: f32[104,128], index: 2, kind: input, shape index: {}]
  %s3 = inlined_call_operand.vmem [shape: f32[256,128], index: 3, kind: output, shape index: {}]
  %s4 = sld [smem:[#allocation0]]
  $region22: #{forward.1} parent=0
    _
  %s6 = ssub.s32 1, %s4
  %s7 = scalar_select 0, %s6, %s4
  // Predicated region
  $region2: #{forward.1} parent=0 // pred_check
    _
  $region3: #{forward.1} parent=0 // pred_check_branch
    %9 = sbr.rel (0) target = $region5
  $region4: #{forward.1} parent=0 // pred_region
    _
  $region5: #{forward.1} parent=0 // pred_fallthru
    _
  // Predicated region
  $region6: #{forward.1} parent=0 // pred_check
    _
  $region7: #{forward.1} parent=0 // pred_check_branch
    %11 = sbr.rel (0) target = $region9
  $region8: #{forward.1} parent=0 // pred_region
    _
  $region9: #{forward.1} parent=0 // pred_fallthru
    _
  // Predicated region
  $region10: #{forward.1} parent=0 // pred_check
    _
  $region11: #{forward.1} parent=0 // pred_check_branch
    %13 = sbr.rel (0) target = $region13
  $region12: #{forward.1} parent=0 // pred_region
    _
  $region13: #{forward.1} parent=0 // pred_fallthru
    _
  %v14 = vld [vmem:[%s1] sm:$0xff]
  %v15 = vld [vmem:[%s1 + $0x8] sm:$0xff]
  %v16 = vld [vmem:[%s1 + $0x10] sm:$0xff]
  %v17 = vld [vmem:[%s1 + $0x18] sm:$0xff]
  %v18 = vld [vmem:[%s1 + $0x20] sm:$0xff]
  %v19 = vld [vmem:[%s1 + $0x28] sm:$0xff]
  %v20 = vld [vmem:[%s1 + $0x30] sm:$0xff]
  %v21 = vld [vmem:[%s1 + $0x38] sm:$0xff]
  %v22 = vld [vmem:[%s1 + $0x40] sm:$0xff]
  %v23 = vld [vmem:[%s1 + $0x48] sm:$0xff]
  %v24 = vld [vmem:[%s1 + $0x50] sm:$0xff]
  %v25 = vld [vmem:[%s1 + $0x58] sm:$0xff]
  %v26 = vld [vmem:[%s1 + $0x60] sm:$0xff]
  %v27 = vld [vmem:[%s1 + $0x68] sm:$0xff]
  %v28 = vld [vmem:[%s1 + $0x70] sm:$0xff]
  %v29 = vld [vmem:[%s1 + $0x78] sm:$0xff]
  %v30 = vld [vmem:[%s1 + $0x80] sm:$0xff]
  %v31 = vld [vmem:[%s1 + $0x88] sm:$0xff]
  %v32 = vld [vmem:[%s1 + $0x90] sm:$0xff]
  %v33 = vld [vmem:[%s1 + $0x98] sm:$0xff]
  %v34 = vld [vmem:[%s1 + $0xa0] sm:$0xff]
  %v35 = vld [vmem:[%s1 + $0xa8] sm:$0xff]
  %v36 = vld [vmem:[%s1 + $0xb0] sm:$0xff]
  %v37 = vld [vmem:[%s1 + $0xb8] sm:$0xff]
  %v38 = vld [vmem:[%s1 + $0xc0] sm:$0xff]
  %v39 = vld [vmem:[%s1 + $0xc8] sm:$0xff]
  %v40 = vld [vmem:[%s1 + $0xd0] sm:$0xff]
  %v41 = vld [vmem:[%s1 + $0xd8] sm:$0xff]
  %v42 = vld [vmem:[%s1 + $0xe0] sm:$0xff]
  %v43 = vld [vmem:[%s1 + $0xe8] sm:$0xff]
  %v44 = vld [vmem:[%s1 + $0xf0] sm:$0xff]
  %v45 = vld [vmem:[%s1 + $0xf8] sm:$0xff]
  %v46 = vld [vmem:[%s2] sm:$0xff]
  %v47 = vld [vmem:[%s2 + $0x8] sm:$0xff]
  %v48 = vld [vmem:[%s2 + $0x10] sm:$0x1]
  %v49 = vperm.slane %v48, 0
  %vm50 = vcmask 130048
  %v52 = vsel %vm50, %v14, 0
  %v55 = vsel %vm50, %v15, 0
  %v58 = vsel %vm50, %v16, 0
  %v61 = vsel %vm50, %v17, 0
  %v64 = vsel %vm50, %v18, 0
  %v67 = vsel %vm50, %v19, 0
  %v70 = vsel %vm50, %v20, 0
  %v73 = vsel %vm50, %v21, 0
  %v76 = vsel %vm50, %v22, 0
  %v79 = vsel %vm50, %v23, 0
  %v82 = vsel %vm50, %v24, 0
  %v85 = vsel %vm50, %v25, 0
  %v88 = vsel %vm50, %v26, 0
  %v91 = vsel %vm50, %v27, 0
  %v94 = vsel %vm50, %v28, 0
  %v97 = vsel %vm50, %v29, 0
  %v100 = vsel %vm50, %v30, 0
  %v103 = vsel %vm50, %v31, 0
  %v106 = vsel %vm50, %v32, 0
  %v109 = vsel %vm50, %v33, 0
  %v112 = vsel %vm50, %v34, 0
  %v115 = vsel %vm50, %v35, 0
  %v118 = vsel %vm50, %v36, 0
  %v121 = vsel %vm50, %v37, 0
  %v124 = vsel %vm50, %v38, 0
  %v127 = vsel %vm50, %v39, 0
  %v130 = vsel %vm50, %v40, 0
  %v133 = vsel %vm50, %v41, 0
  %v136 = vsel %vm50, %v42, 0
  %v139 = vsel %vm50, %v43, 0
  %v142 = vsel %vm50, %v44, 0
  %v145 = vsel %vm50, %v45, 0
  %147 = vmatpush.msra.mxu0 0.0
  %148 = vmatpush.msra.mxu0 0.0
  %149 = vmatpush.msra.mxu0 0.0
  %150 = vmatpush.msra.mxu0 0.0
  %151 = vmatpush.msra.mxu0 0.0
  %152 = vmatpush.msra.mxu0 0.0
  %153 = vmatpush.msra.mxu0 0.0
  %154 = vmatpush.msra.mxu0 0.0
  %155 = vmatpush.msra.mxu0 0.0
  %156 = vmatpush.msra.mxu0 0.0
  %157 = vmatpush.msra.mxu0 0.0
  %158 = vmatpush.msra.mxu0 0.0
  %159 = vmatpush.msra.mxu0 0.0
  %160 = vmatpush.msra.mxu0 0.0
  %161 = vmatpush.msra.mxu0 %v47
  %162 = vmatpush.msra.mxu0 %v46
  %163 = vmatmul.f32.gmra.mxu0 %v52
  %v164 = vpop.f32.mrf.mxu0
  %v165 = vadd.f32 %v49, %v164
  %166 = vmatmul.f32.gmra.mxu0 %v55
  %v167 = vpop.f32.mrf.mxu0
  %v168 = vadd.f32 %v49, %v167
  %169 = vmatmul.f32.gmra.mxu0 %v58
  %v170 = vpop.f32.mrf.mxu0
  %v171 = vadd.f32 %v49, %v170
  %172 = vmatmul.f32.gmra.mxu0 %v61
  %v173 = vpop.f32.mrf.mxu0
  %v174 = vadd.f32 %v49, %v173
  %175 = vmatmul.f32.gmra.mxu0 %v64
  %v176 = vpop.f32.mrf.mxu0
  %v177 = vadd.f32 %v49, %v176
  %178 = vmatmul.f32.gmra.mxu0 %v67
  %v179 = vpop.f32.mrf.mxu0
  %v180 = vadd.f32 %v49, %v179
  %181 = vmatmul.f32.gmra.mxu0 %v70
  %v182 = vpop.f32.mrf.mxu0
  %v183 = vadd.f32 %v49, %v182
  %184 = vmatmul.f32.gmra.mxu0 %v73
  %v185 = vpop.f32.mrf.mxu0
  %v186 = vadd.f32 %v49, %v185
  %187 = vmatmul.f32.gmra.mxu0 %v76
  %v188 = vpop.f32.mrf.mxu0
  %v189 = vadd.f32 %v49, %v188
  %190 = vmatmul.f32.gmra.mxu0 %v79
  %v191 = vpop.f32.mrf.mxu0
  %v192 = vadd.f32 %v49, %v191
  %193 = vmatmul.f32.gmra.mxu0 %v82
  %v194 = vpop.f32.mrf.mxu0
  %v195 = vadd.f32 %v49, %v194
  %196 = vmatmul.f32.gmra.mxu0 %v85
  %v197 = vpop.f32.mrf.mxu0
  %v198 = vadd.f32 %v49, %v197
  %199 = vmatmul.f32.gmra.mxu0 %v88
  %v200 = vpop.f32.mrf.mxu0
  %v201 = vadd.f32 %v49, %v200
  %202 = vmatmul.f32.gmra.mxu0 %v91
  %v203 = vpop.f32.mrf.mxu0
  %v204 = vadd.f32 %v49, %v203
  %205 = vmatmul.f32.gmra.mxu0 %v94
  %v206 = vpop.f32.mrf.mxu0
  %v207 = vadd.f32 %v49, %v206
  %208 = vmatmul.f32.gmra.mxu0 %v97
  %v209 = vpop.f32.mrf.mxu0
  %v210 = vadd.f32 %v49, %v209
  %211 = vmatmul.f32.gmra.mxu0 %v100
  %v212 = vpop.f32.mrf.mxu0
  %v213 = vadd.f32 %v49, %v212
  %214 = vmatmul.f32.gmra.mxu0 %v103
  %v215 = vpop.f32.mrf.mxu0
  %v216 = vadd.f32 %v49, %v215
  %217 = vmatmul.f32.gmra.mxu0 %v106
  %v218 = vpop.f32.mrf.mxu0
  %v219 = vadd.f32 %v49, %v218
  %220 = vmatmul.f32.gmra.mxu0 %v109
  %v221 = vpop.f32.mrf.mxu0
  %v222 = vadd.f32 %v49, %v221
  %223 = vmatmul.f32.gmra.mxu0 %v112
  %v224 = vpop.f32.mrf.mxu0
  %v225 = vadd.f32 %v49, %v224
  %226 = vmatmul.f32.gmra.mxu0 %v115
  %v227 = vpop.f32.mrf.mxu0
  %v228 = vadd.f32 %v49, %v227
  %229 = vmatmul.f32.gmra.mxu0 %v118
  %v230 = vpop.f32.mrf.mxu0
  %v231 = vadd.f32 %v49, %v230
  %232 = vmatmul.f32.gmra.mxu0 %v121
  %v233 = vpop.f32.mrf.mxu0
  %v234 = vadd.f32 %v49, %v233
  %235 = vmatmul.f32.gmra.mxu0 %v124
  %v236 = vpop.f32.mrf.mxu0
  %v237 = vadd.f32 %v49, %v236
  %238 = vmatmul.f32.gmra.mxu0 %v127
  %v239 = vpop.f32.mrf.mxu0
  %v240 = vadd.f32 %v49, %v239
  %241 = vmatmul.f32.gmra.mxu0 %v130
  %v242 = vpop.f32.mrf.mxu0
  %v243 = vadd.f32 %v49, %v242
  %244 = vmatmul.f32.gmra.mxu0 %v133
  %v245 = vpop.f32.mrf.mxu0
  %v246 = vadd.f32 %v49, %v245
  %247 = vmatmul.f32.gmra.mxu0 %v136
  %v248 = vpop.f32.mrf.mxu0
  %v249 = vadd.f32 %v49, %v248
  %250 = vmatmul.f32.gmra.mxu0 %v139
  %v251 = vpop.f32.mrf.mxu0
  %v252 = vadd.f32 %v49, %v251
  %253 = vmatmul.f32.gmra.mxu0 %v142
  %v254 = vpop.f32.mrf.mxu0
  %v255 = vadd.f32 %v49, %v254
  %256 = vmatmul.f32.gmra.mxu0 %v145
  %v257 = vpop.f32.mrf.mxu0
  %v258 = vadd.f32 %v49, %v257
  %259 = vdwg.mxu0
  %v260 = vld [vmem:[%s0] sm:$0xff]
  %v261 = vld [vmem:[%s0 + $0x8] sm:$0xff]
  %v262 = vld [vmem:[%s0 + $0x10] sm:$0xff]
  %v263 = vld [vmem:[%s0 + $0x18] sm:$0xff]
  %v264 = vld [vmem:[%s0 + $0x20] sm:$0xff]
  %v265 = vld [vmem:[%s0 + $0x28] sm:$0xff]
  %v266 = vld [vmem:[%s0 + $0x30] sm:$0xff]
  %v267 = vld [vmem:[%s0 + $0x38] sm:$0xff]
  %v268 = vld [vmem:[%s0 + $0x40] sm:$0xff]
  %v269 = vld [vmem:[%s0 + $0x48] sm:$0xff]
  %v270 = vld [vmem:[%s0 + $0x50] sm:$0xff]
  %v271 = vld [vmem:[%s0 + $0x58] sm:$0xff]
  %v272 = vld [vmem:[%s0 + $0x60] sm:$0xff]
  %v273 = vld [vmem:[%s0 + $0x68] sm:$0xff]
  %v274 = vld [vmem:[%s0 + $0x70] sm:$0xff]
  %v275 = vld [vmem:[%s0 + $0x78] sm:$0xff]
  %v276 = vld [vmem:[%s0 + $0x80] sm:$0xff]
  %v277 = vld [vmem:[%s0 + $0x88] sm:$0xff]
  %v278 = vld [vmem:[%s0 + $0x90] sm:$0xff]
  %v279 = vld [vmem:[%s0 + $0x98] sm:$0xff]
  %v280 = vld [vmem:[%s0 + $0xa0] sm:$0xff]
  %v281 = vld [vmem:[%s0 + $0xa8] sm:$0xff]
  %v282 = vld [vmem:[%s0 + $0xb0] sm:$0xff]
  %v283 = vld [vmem:[%s0 + $0xb8] sm:$0xff]
  %v284 = vld [vmem:[%s0 + $0xc0] sm:$0xff]
  %v285 = vld [vmem:[%s0 + $0xc8] sm:$0xff]
  %v286 = vld [vmem:[%s0 + $0xd0] sm:$0xff]
  %v287 = vld [vmem:[%s0 + $0xd8] sm:$0xff]
  %v288 = vld [vmem:[%s0 + $0xe0] sm:$0xff]
  %v289 = vld [vmem:[%s0 + $0xe8] sm:$0xff]
  %v290 = vld [vmem:[%s0 + $0xf0] sm:$0xff]
  %v291 = vld [vmem:[%s0 + $0xf8] sm:$0xff]
  %v292 = vpack.c.bf16 %v168, %v165
  %v293 = vpack.c.bf16 %v174, %v171
  %v294 = vpack.c.bf16 %v180, %v177
  %v295 = vpack.c.bf16 %v186, %v183
  %v296 = vpack.c.bf16 %v192, %v189
  %v297 = vpack.c.bf16 %v198, %v195
  %v298 = vpack.c.bf16 %v204, %v201
  %v299 = vpack.c.bf16 %v210, %v207
  %v300 = vpack.c.bf16 %v216, %v213
  %v301 = vpack.c.bf16 %v222, %v219
  %v302 = vpack.c.bf16 %v228, %v225
  %v303 = vpack.c.bf16 %v234, %v231
  %v304 = vpack.c.bf16 %v240, %v237
  %v305 = vpack.c.bf16 %v246, %v243
  %v306 = vpack.c.bf16 %v252, %v249
  %v307 = vpack.c.bf16 %v258, %v255
  %v340 = vunpack.c.l.b16 %v260
  %v341 = vunpack.c.h.b16 %v260
  %v342 = vunpack.c.l.b16 %v261
  %v343 = vunpack.c.h.b16 %v261
  %v344 = vunpack.c.l.b16 %v262
  %v345 = vunpack.c.h.b16 %v262
  %v346 = vunpack.c.l.b16 %v263
  %v347 = vunpack.c.h.b16 %v263
  %v348 = vunpack.c.l.b16 %v264
  %v349 = vunpack.c.h.b16 %v264
  %v350 = vunpack.c.l.b16 %v265
  %v351 = vunpack.c.h.b16 %v265
  %v352 = vunpack.c.l.b16 %v266
  %v353 = vunpack.c.h.b16 %v266
  %v354 = vunpack.c.l.b16 %v267
  %v355 = vunpack.c.h.b16 %v267
  %v356 = vunpack.c.l.b16 %v268
  %v357 = vunpack.c.h.b16 %v268
  %v358 = vunpack.c.l.b16 %v269
  %v359 = vunpack.c.h.b16 %v269
  %v360 = vunpack.c.l.b16 %v270
  %v361 = vunpack.c.h.b16 %v270
  %v362 = vunpack.c.l.b16 %v271
  %v363 = vunpack.c.h.b16 %v271
  %v364 = vunpack.c.l.b16 %v272
  %v365 = vunpack.c.h.b16 %v272
  %v366 = vunpack.c.l.b16 %v273
  %v367 = vunpack.c.h.b16 %v273
  %v368 = vunpack.c.l.b16 %v274
  %v369 = vunpack.c.h.b16 %v274
  %v370 = vunpack.c.l.b16 %v275
  %v371 = vunpack.c.h.b16 %v275
  %v372 = vunpack.c.l.b16 %v276
  %v373 = vunpack.c.h.b16 %v276
  %v374 = vunpack.c.l.b16 %v277
  %v375 = vunpack.c.h.b16 %v277
  %v376 = vunpack.c.l.b16 %v278
  %v377 = vunpack.c.h.b16 %v278
  %v378 = vunpack.c.l.b16 %v279
  %v379 = vunpack.c.h.b16 %v279
  %v380 = vunpack.c.l.b16 %v280
  %v381 = vunpack.c.h.b16 %v280
  %v382 = vunpack.c.l.b16 %v281
  %v383 = vunpack.c.h.b16 %v281
  %v384 = vunpack.c.l.b16 %v282
  %v385 = vunpack.c.h.b16 %v282
  %v386 = vunpack.c.l.b16 %v283
  %v387 = vunpack.c.h.b16 %v283
  %v388 = vunpack.c.l.b16 %v284
  %v389 = vunpack.c.h.b16 %v284
  %v390 = vunpack.c.l.b16 %v285
  %v391 = vunpack.c.h.b16 %v285
  %v392 = vunpack.c.l.b16 %v286
  %v393 = vunpack.c.h.b16 %v286
  %v394 = vunpack.c.l.b16 %v287
  %v395 = vunpack.c.h.b16 %v287
  %v396 = vunpack.c.l.b16 %v288
  %v397 = vunpack.c.h.b16 %v288
  %v398 = vunpack.c.l.b16 %v289
  %v399 = vunpack.c.h.b16 %v289
  %v400 = vunpack.c.l.b16 %v290
  %v401 = vunpack.c.h.b16 %v290
  %v402 = vunpack.c.l.b16 %v291
  %v403 = vunpack.c.h.b16 %v291
  %v404 = vpack.c.b16 %v342, %v340
  %v405 = vpack.c.b16 %v343, %v341
  %v406 = vpack.c.b16 %v346, %v344
  %v407 = vpack.c.b16 %v347, %v345
  %v408 = vpack.c.b16 %v350, %v348
  %v409 = vpack.c.b16 %v351, %v349
  %v410 = vpack.c.b16 %v354, %v352
  %v411 = vpack.c.b16 %v355, %v353
  %v412 = vpack.c.b16 %v358, %v356
  %v413 = vpack.c.b16 %v359, %v357
  %v414 = vpack.c.b16 %v362, %v360
  %v415 = vpack.c.b16 %v363, %v361
  %v416 = vpack.c.b16 %v366, %v364
  %v417 = vpack.c.b16 %v367, %v365
  %v418 = vpack.c.b16 %v370, %v368
  %v419 = vpack.c.b16 %v371, %v369
  %v420 = vpack.c.b16 %v374, %v372
  %v421 = vpack.c.b16 %v375, %v373
  %v422 = vpack.c.b16 %v378, %v376
  %v423 = vpack.c.b16 %v379, %v377
  %v424 = vpack.c.b16 %v382, %v380
  %v425 = vpack.c.b16 %v383, %v381
  %v426 = vpack.c.b16 %v386, %v384
  %v427 = vpack.c.b16 %v387, %v385
  %v428 = vpack.c.b16 %v390, %v388
  %v429 = vpack.c.b16 %v391, %v389
  %v430 = vpack.c.b16 %v394, %v392
  %v431 = vpack.c.b16 %v395, %v393
  %v432 = vpack.c.b16 %v398, %v396
  %v433 = vpack.c.b16 %v399, %v397
  %v434 = vpack.c.b16 %v402, %v400
  %v435 = vpack.c.b16 %v403, %v401
  %468 = vmatpush.bf16.msra.mxu0 %v299
  %469 = vmatpush.bf16.msra.mxu0 %v298
  %470 = vmatpush.bf16.msra.mxu0 %v297
  %471 = vmatpush.bf16.msra.mxu0 %v296
  %472 = vmatpush.bf16.msra.mxu0 %v295
  %473 = vmatpush.bf16.msra.mxu0 %v294
  %474 = vmatpush.bf16.msra.mxu0 %v293
  %475 = vmatpush.bf16.msra.mxu0 %v292
  %476 = vmatmul.bf16.gmra.mxu0 %v404
  %v477 = vpop.f32.mrf.mxu0
  %v478 = vadd.f32 0.0, %v477
  %v479 = vpop.f32.mrf.mxu0
  %v480 = vadd.f32 0.0, %v479
  %481 = vmatmul.bf16.gmra.mxu0 %v406
  %v482 = vpop.f32.mrf.mxu0
  %v483 = vadd.f32 0.0, %v482
  %v484 = vpop.f32.mrf.mxu0
  %v485 = vadd.f32 0.0, %v484
  %486 = vmatmul.bf16.gmra.mxu0 %v408
  %v487 = vpop.f32.mrf.mxu0
  %v488 = vadd.f32 0.0, %v487
  %v489 = vpop.f32.mrf.mxu0
  %v490 = vadd.f32 0.0, %v489
  %491 = vmatmul.bf16.gmra.mxu0 %v410
  %v492 = vpop.f32.mrf.mxu0
  %v493 = vadd.f32 0.0, %v492
  %v494 = vpop.f32.mrf.mxu0
  %v495 = vadd.f32 0.0, %v494
  %496 = vmatmul.bf16.gmra.mxu0 %v412
  %v497 = vpop.f32.mrf.mxu0
  %v498 = vadd.f32 0.0, %v497
  %v499 = vpop.f32.mrf.mxu0
  %v500 = vadd.f32 0.0, %v499
  %501 = vmatmul.bf16.gmra.mxu0 %v414
  %v502 = vpop.f32.mrf.mxu0
  %v503 = vadd.f32 0.0, %v502
  %v504 = vpop.f32.mrf.mxu0
  %v505 = vadd.f32 0.0, %v504
  %506 = vmatmul.bf16.gmra.mxu0 %v416
  %v507 = vpop.f32.mrf.mxu0
  %v508 = vadd.f32 0.0, %v507
  %v509 = vpop.f32.mrf.mxu0
  %v510 = vadd.f32 0.0, %v509
  %511 = vmatmul.bf16.gmra.mxu0 %v418
  %v512 = vpop.f32.mrf.mxu0
  %v513 = vadd.f32 0.0, %v512
  %v514 = vpop.f32.mrf.mxu0
  %v515 = vadd.f32 0.0, %v514
  %516 = vmatmul.bf16.gmra.mxu0 %v420
  %v517 = vpop.f32.mrf.mxu0
  %v518 = vadd.f32 0.0, %v517
  %v519 = vpop.f32.mrf.mxu0
  %v520 = vadd.f32 0.0, %v519
  %521 = vmatmul.bf16.gmra.mxu0 %v422
  %v522 = vpop.f32.mrf.mxu0
  %v523 = vadd.f32 0.0, %v522
  %v524 = vpop.f32.mrf.mxu0
  %v525 = vadd.f32 0.0, %v524
  %526 = vmatmul.bf16.gmra.mxu0 %v424
  %v527 = vpop.f32.mrf.mxu0
  %v528 = vadd.f32 0.0, %v527
  %v529 = vpop.f32.mrf.mxu0
  %v530 = vadd.f32 0.0, %v529
  %531 = vmatmul.bf16.gmra.mxu0 %v426
  %v532 = vpop.f32.mrf.mxu0
  %v533 = vadd.f32 0.0, %v532
  %v534 = vpop.f32.mrf.mxu0
  %v535 = vadd.f32 0.0, %v534
  %536 = vmatmul.bf16.gmra.mxu0 %v428
  %v537 = vpop.f32.mrf.mxu0
  %v538 = vadd.f32 0.0, %v537
  %v539 = vpop.f32.mrf.mxu0
  %v540 = vadd.f32 0.0, %v539
  %541 = vmatmul.bf16.gmra.mxu0 %v430
  %v542 = vpop.f32.mrf.mxu0
  %v543 = vadd.f32 0.0, %v542
  %v544 = vpop.f32.mrf.mxu0
  %v545 = vadd.f32 0.0, %v544
  %546 = vmatmul.bf16.gmra.mxu0 %v432
  %v547 = vpop.f32.mrf.mxu0
  %v548 = vadd.f32 0.0, %v547
  %v549 = vpop.f32.mrf.mxu0
  %v550 = vadd.f32 0.0, %v549
  %551 = vmatmul.bf16.gmra.mxu0 %v434
  %v552 = vpop.f32.mrf.mxu0
  %v553 = vadd.f32 0.0, %v552
  %v554 = vpop.f32.mrf.mxu0
  %v555 = vadd.f32 0.0, %v554
  %556 = vdwg.mxu0
  %557 = vmatpush.bf16.msra.mxu0 %v307
  %558 = vmatpush.bf16.msra.mxu0 %v306
  %559 = vmatpush.bf16.msra.mxu0 %v305
  %560 = vmatpush.bf16.msra.mxu0 %v304
  %561 = vmatpush.bf16.msra.mxu0 %v303
  %562 = vmatpush.bf16.msra.mxu0 %v302
  %563 = vmatpush.bf16.msra.mxu0 %v301
  %564 = vmatpush.bf16.msra.mxu0 %v300
  %565 = vmatmul.bf16.gmra.mxu0 %v405
  %v566 = vpop.f32.mrf.mxu0
  %v567 = vadd.f32 %v478, %v566
  %v568 = vpop.f32.mrf.mxu0
  %v569 = vadd.f32 %v480, %v568
  %570 = vmatmul.bf16.gmra.mxu0 %v407
  %v571 = vpop.f32.mrf.mxu0
  %v572 = vadd.f32 %v483, %v571
  %v573 = vpop.f32.mrf.mxu0
  %v574 = vadd.f32 %v485, %v573
  %575 = vmatmul.bf16.gmra.mxu0 %v409
  %v576 = vpop.f32.mrf.mxu0
  %v577 = vadd.f32 %v488, %v576
  %v578 = vpop.f32.mrf.mxu0
  %v579 = vadd.f32 %v490, %v578
  %580 = vmatmul.bf16.gmra.mxu0 %v411
  %v581 = vpop.f32.mrf.mxu0
  %v582 = vadd.f32 %v493, %v581
  %v583 = vpop.f32.mrf.mxu0
  %v584 = vadd.f32 %v495, %v583
  %585 = vmatmul.bf16.gmra.mxu0 %v413
  %v586 = vpop.f32.mrf.mxu0
  %v587 = vadd.f32 %v498, %v586
  %v588 = vpop.f32.mrf.mxu0
  %v589 = vadd.f32 %v500, %v588
  %590 = vmatmul.bf16.gmra.mxu0 %v415
  %v591 = vpop.f32.mrf.mxu0
  %v592 = vadd.f32 %v503, %v591
  %v593 = vpop.f32.mrf.mxu0
  %v594 = vadd.f32 %v505, %v593
  %595 = vmatmul.bf16.gmra.mxu0 %v417
  %v596 = vpop.f32.mrf.mxu0
  %v597 = vadd.f32 %v508, %v596
  %v598 = vpop.f32.mrf.mxu0
  %v599 = vadd.f32 %v510, %v598
  %600 = vmatmul.bf16.gmra.mxu0 %v419
  %v601 = vpop.f32.mrf.mxu0
  %v602 = vadd.f32 %v513, %v601
  %v603 = vpop.f32.mrf.mxu0
  %v604 = vadd.f32 %v515, %v603
  %605 = vmatmul.bf16.gmra.mxu0 %v421
  %v606 = vpop.f32.mrf.mxu0
  %v607 = vadd.f32 %v518, %v606
  %v608 = vpop.f32.mrf.mxu0
  %v609 = vadd.f32 %v520, %v608
  %610 = vmatmul.bf16.gmra.mxu0 %v423
  %v611 = vpop.f32.mrf.mxu0
  %v612 = vadd.f32 %v523, %v611
  %v613 = vpop.f32.mrf.mxu0
  %v614 = vadd.f32 %v525, %v613
  %615 = vmatmul.bf16.gmra.mxu0 %v425
  %v616 = vpop.f32.mrf.mxu0
  %v617 = vadd.f32 %v528, %v616
  %v618 = vpop.f32.mrf.mxu0
  %v619 = vadd.f32 %v530, %v618
  %620 = vmatmul.bf16.gmra.mxu0 %v427
  %v621 = vpop.f32.mrf.mxu0
  %v622 = vadd.f32 %v533, %v621
  %v623 = vpop.f32.mrf.mxu0
  %v624 = vadd.f32 %v535, %v623
  %625 = vmatmul.bf16.gmra.mxu0 %v429
  %v626 = vpop.f32.mrf.mxu0
  %v627 = vadd.f32 %v538, %v626
  %v628 = vpop.f32.mrf.mxu0
  %v629 = vadd.f32 %v540, %v628
  %630 = vmatmul.bf16.gmra.mxu0 %v431
  %v631 = vpop.f32.mrf.mxu0
  %v632 = vadd.f32 %v543, %v631
  %v633 = vpop.f32.mrf.mxu0
  %v634 = vadd.f32 %v545, %v633
  %635 = vmatmul.bf16.gmra.mxu0 %v433
  %v636 = vpop.f32.mrf.mxu0
  %v637 = vadd.f32 %v548, %v636
  %v638 = vpop.f32.mrf.mxu0
  %v639 = vadd.f32 %v550, %v638
  %640 = vmatmul.bf16.gmra.mxu0 %v435
  %v641 = vpop.f32.mrf.mxu0
  %v642 = vadd.f32 %v553, %v641
  %v643 = vpop.f32.mrf.mxu0
  %v644 = vadd.f32 %v555, %v643
  %645 = vdwg.mxu0
  %v646 = vmax.f32 %v567, 0.0
  %v647 = vmax.f32 %v569, 0.0
  %v648 = vmax.f32 %v572, 0.0
  %v649 = vmax.f32 %v574, 0.0
  %v650 = vmax.f32 %v577, 0.0
  %v651 = vmax.f32 %v579, 0.0
  %v652 = vmax.f32 %v582, 0.0
  %v653 = vmax.f32 %v584, 0.0
  %v654 = vmax.f32 %v587, 0.0
  %v655 = vmax.f32 %v589, 0.0
  %v656 = vmax.f32 %v592, 0.0
  %v657 = vmax.f32 %v594, 0.0
  %v658 = vmax.f32 %v597, 0.0
  %v659 = vmax.f32 %v599, 0.0
  %v660 = vmax.f32 %v602, 0.0
  %v661 = vmax.f32 %v604, 0.0
  %v662 = vmax.f32 %v607, 0.0
  %v663 = vmax.f32 %v609, 0.0
  %v664 = vmax.f32 %v612, 0.0
  %v665 = vmax.f32 %v614, 0.0
  %v666 = vmax.f32 %v617, 0.0
  %v667 = vmax.f32 %v619, 0.0
  %v668 = vmax.f32 %v622, 0.0
  %v669 = vmax.f32 %v624, 0.0
  %v670 = vmax.f32 %v627, 0.0
  %v671 = vmax.f32 %v629, 0.0
  %v672 = vmax.f32 %v632, 0.0
  %v673 = vmax.f32 %v634, 0.0
  %v674 = vmax.f32 %v637, 0.0
  %v675 = vmax.f32 %v639, 0.0
  %v676 = vmax.f32 %v642, 0.0
  %v677 = vmax.f32 %v644, 0.0
  %v678 = vld [vmem:[%s2 + $0x18] sm:$0xff]
  %v679 = vld [vmem:[%s2 + $0x20] sm:$0xff]
  %v680 = vld [vmem:[%s2 + $0x28] sm:$0xff]
  %v681 = vld [vmem:[%s2 + $0x30] sm:$0xff]
  %v682 = vld [vmem:[%s2 + $0x38] sm:$0x1]
  %v683 = vperm.slane %v682, 0
  %vm684 = vcmask 261120
  %v686 = vsel %vm684, %v646, 0
  %v689 = vsel %vm684, %v647, 0
  %v692 = vsel %vm684, %v648, 0
  %v695 = vsel %vm684, %v649, 0
  %v698 = vsel %vm684, %v650, 0
  %v701 = vsel %vm684, %v651, 0
  %v704 = vsel %vm684, %v652, 0
  %v707 = vsel %vm684, %v653, 0
  %v710 = vsel %vm684, %v654, 0
  %v713 = vsel %vm684, %v655, 0
  %v716 = vsel %vm684, %v656, 0
  %v719 = vsel %vm684, %v657, 0
  %v722 = vsel %vm684, %v658, 0
  %v725 = vsel %vm684, %v659, 0
  %v728 = vsel %vm684, %v660, 0
  %v731 = vsel %vm684, %v661, 0
  %v734 = vsel %vm684, %v662, 0
  %v737 = vsel %vm684, %v663, 0
  %v740 = vsel %vm684, %v664, 0
  %v743 = vsel %vm684, %v665, 0
  %v746 = vsel %vm684, %v666, 0
  %v749 = vsel %vm684, %v667, 0
  %v752 = vsel %vm684, %v668, 0
  %v755 = vsel %vm684, %v669, 0
  %v758 = vsel %vm684, %v670, 0
  %v761 = vsel %vm684, %v671, 0
  %v764 = vsel %vm684, %v672, 0
  %v767 = vsel %vm684, %v673, 0
  %v770 = vsel %vm684, %v674, 0
  %v773 = vsel %vm684, %v675, 0
  %v776 = vsel %vm684, %v676, 0
  %v779 = vsel %vm684, %v677, 0
  %781 = vmatpush.msra.mxu0 0.0
  %782 = vmatpush.msra.mxu0 0.0
  %783 = vmatpush.msra.mxu0 0.0
  %784 = vmatpush.msra.mxu0 0.0
  %785 = vmatpush.msra.mxu0 0.0
  %786 = vmatpush.msra.mxu0 0.0
  %787 = vmatpush.msra.mxu0 0.0
  %788 = vmatpush.msra.mxu0 0.0
  %789 = vmatpush.msra.mxu0 0.0
  %790 = vmatpush.msra.mxu0 0.0
  %791 = vmatpush.msra.mxu0 0.0
  %792 = vmatpush.msra.mxu0 0.0
  %793 = vmatpush.msra.mxu0 %v681
  %794 = vmatpush.msra.mxu0 %v680
  %795 = vmatpush.msra.mxu0 %v679
  %796 = vmatpush.msra.mxu0 %v678
  %797 = vmatmul.f32.gmra.mxu0 %v686
  %v798 = vpop.f32.mrf.mxu0
  %v799 = vadd.f32 %v683, %v798
  %800 = vmatmul.f32.gmra.mxu0 %v689
  %v801 = vpop.f32.mrf.mxu0
  %v802 = vadd.f32 %v683, %v801
  %803 = vmatmul.f32.gmra.mxu0 %v692
  %v804 = vpop.f32.mrf.mxu0
  %v805 = vadd.f32 %v683, %v804
  %806 = vmatmul.f32.gmra.mxu0 %v695
  %v807 = vpop.f32.mrf.mxu0
  %v808 = vadd.f32 %v683, %v807
  %809 = vmatmul.f32.gmra.mxu0 %v698
  %v810 = vpop.f32.mrf.mxu0
  %v811 = vadd.f32 %v683, %v810
  %812 = vmatmul.f32.gmra.mxu0 %v701
  %v813 = vpop.f32.mrf.mxu0
  %v814 = vadd.f32 %v683, %v813
  %815 = vmatmul.f32.gmra.mxu0 %v704
  %v816 = vpop.f32.mrf.mxu0
  %v817 = vadd.f32 %v683, %v816
  %818 = vmatmul.f32.gmra.mxu0 %v707
  %v819 = vpop.f32.mrf.mxu0
  %v820 = vadd.f32 %v683, %v819
  %821 = vmatmul.f32.gmra.mxu0 %v710
  %v822 = vpop.f32.mrf.mxu0
  %v823 = vadd.f32 %v683, %v822
  %824 = vmatmul.f32.gmra.mxu0 %v713
  %v825 = vpop.f32.mrf.mxu0
  %v826 = vadd.f32 %v683, %v825
  %827 = vmatmul.f32.gmra.mxu0 %v716
  %v828 = vpop.f32.mrf.mxu0
  %v829 = vadd.f32 %v683, %v828
  %830 = vmatmul.f32.gmra.mxu0 %v719
  %v831 = vpop.f32.mrf.mxu0
  %v832 = vadd.f32 %v683, %v831
  %833 = vmatmul.f32.gmra.mxu0 %v722
  %v834 = vpop.f32.mrf.mxu0
  %v835 = vadd.f32 %v683, %v834
  %836 = vmatmul.f32.gmra.mxu0 %v725
  %v837 = vpop.f32.mrf.mxu0
  %v838 = vadd.f32 %v683, %v837
  %839 = vmatmul.f32.gmra.mxu0 %v728
  %v840 = vpop.f32.mrf.mxu0
  %v841 = vadd.f32 %v683, %v840
  %842 = vmatmul.f32.gmra.mxu0 %v731
  %v843 = vpop.f32.mrf.mxu0
  %v844 = vadd.f32 %v683, %v843
  %845 = vmatmul.f32.gmra.mxu0 %v734
  %v846 = vpop.f32.mrf.mxu0
  %v847 = vadd.f32 %v683, %v846
  %848 = vmatmul.f32.gmra.mxu0 %v737
  %v849 = vpop.f32.mrf.mxu0
  %v850 = vadd.f32 %v683, %v849
  %851 = vmatmul.f32.gmra.mxu0 %v740
  %v852 = vpop.f32.mrf.mxu0
  %v853 = vadd.f32 %v683, %v852
  %854 = vmatmul.f32.gmra.mxu0 %v743
  %v855 = vpop.f32.mrf.mxu0
  %v856 = vadd.f32 %v683, %v855
  %857 = vmatmul.f32.gmra.mxu0 %v746
  %v858 = vpop.f32.mrf.mxu0
  %v859 = vadd.f32 %v683, %v858
  %860 = vmatmul.f32.gmra.mxu0 %v749
  %v861 = vpop.f32.mrf.mxu0
  %v862 = vadd.f32 %v683, %v861
  %863 = vmatmul.f32.gmra.mxu0 %v752
  %v864 = vpop.f32.mrf.mxu0
  %v865 = vadd.f32 %v683, %v864
  %866 = vmatmul.f32.gmra.mxu0 %v755
  %v867 = vpop.f32.mrf.mxu0
  %v868 = vadd.f32 %v683, %v867
  %869 = vmatmul.f32.gmra.mxu0 %v758
  %v870 = vpop.f32.mrf.mxu0
  %v871 = vadd.f32 %v683, %v870
  %872 = vmatmul.f32.gmra.mxu0 %v761
  %v873 = vpop.f32.mrf.mxu0
  %v874 = vadd.f32 %v683, %v873
  %875 = vmatmul.f32.gmra.mxu0 %v764
  %v876 = vpop.f32.mrf.mxu0
  %v877 = vadd.f32 %v683, %v876
  %878 = vmatmul.f32.gmra.mxu0 %v767
  %v879 = vpop.f32.mrf.mxu0
  %v880 = vadd.f32 %v683, %v879
  %881 = vmatmul.f32.gmra.mxu0 %v770
  %v882 = vpop.f32.mrf.mxu0
  %v883 = vadd.f32 %v683, %v882
  %884 = vmatmul.f32.gmra.mxu0 %v773
  %v885 = vpop.f32.mrf.mxu0
  %v886 = vadd.f32 %v683, %v885
  %887 = vmatmul.f32.gmra.mxu0 %v776
  %v888 = vpop.f32.mrf.mxu0
  %v889 = vadd.f32 %v683, %v888
  %890 = vmatmul.f32.gmra.mxu0 %v779
  %v891 = vpop.f32.mrf.mxu0
  %v892 = vadd.f32 %v683, %v891
  %893 = vdwg.mxu0
  %v894 = vpack.c.bf16 %v802, %v799
  %v895 = vpack.c.bf16 %v808, %v805
  %v896 = vpack.c.bf16 %v814, %v811
  %v897 = vpack.c.bf16 %v820, %v817
  %v898 = vpack.c.bf16 %v826, %v823
  %v899 = vpack.c.bf16 %v832, %v829
  %v900 = vpack.c.bf16 %v838, %v835
  %v901 = vpack.c.bf16 %v844, %v841
  %v902 = vpack.c.bf16 %v850, %v847
  %v903 = vpack.c.bf16 %v856, %v853
  %v904 = vpack.c.bf16 %v862, %v859
  %v905 = vpack.c.bf16 %v868, %v865
  %v906 = vpack.c.bf16 %v874, %v871
  %v907 = vpack.c.bf16 %v880, %v877
  %v908 = vpack.c.bf16 %v886, %v883
  %v909 = vpack.c.bf16 %v892, %v889
  %910 = vmatpush.bf16.msra.mxu0 %v901
  %911 = vmatpush.bf16.msra.mxu0 %v900
  %912 = vmatpush.bf16.msra.mxu0 %v899
  %913 = vmatpush.bf16.msra.mxu0 %v898
  %914 = vmatpush.bf16.msra.mxu0 %v897
  %915 = vmatpush.bf16.msra.mxu0 %v896
  %916 = vmatpush.bf16.msra.mxu0 %v895
  %917 = vmatpush.bf16.msra.mxu0 %v894
  %918 = vmatmul.bf16.gmra.mxu0 %v404
  %v919 = vpop.f32.mrf.mxu0
  %v920 = vadd.f32 0.0, %v919
  %v921 = vpop.f32.mrf.mxu0
  %v922 = vadd.f32 0.0, %v921
  %923 = vmatmul.bf16.gmra.mxu0 %v406
  %v924 = vpop.f32.mrf.mxu0
  %v925 = vadd.f32 0.0, %v924
  %v926 = vpop.f32.mrf.mxu0
  %v927 = vadd.f32 0.0, %v926
  %928 = vmatmul.bf16.gmra.mxu0 %v408
  %v929 = vpop.f32.mrf.mxu0
  %v930 = vadd.f32 0.0, %v929
  %v931 = vpop.f32.mrf.mxu0
  %v932 = vadd.f32 0.0, %v931
  %933 = vmatmul.bf16.gmra.mxu0 %v410
  %v934 = vpop.f32.mrf.mxu0
  %v935 = vadd.f32 0.0, %v934
  %v936 = vpop.f32.mrf.mxu0
  %v937 = vadd.f32 0.0, %v936
  %938 = vmatmul.bf16.gmra.mxu0 %v412
  %v939 = vpop.f32.mrf.mxu0
  %v940 = vadd.f32 0.0, %v939
  %v941 = vpop.f32.mrf.mxu0
  %v942 = vadd.f32 0.0, %v941
  %943 = vmatmul.bf16.gmra.mxu0 %v414
  %v944 = vpop.f32.mrf.mxu0
  %v945 = vadd.f32 0.0, %v944
  %v946 = vpop.f32.mrf.mxu0
  %v947 = vadd.f32 0.0, %v946
  %948 = vmatmul.bf16.gmra.mxu0 %v416
  %v949 = vpop.f32.mrf.mxu0
  %v950 = vadd.f32 0.0, %v949
  %v951 = vpop.f32.mrf.mxu0
  %v952 = vadd.f32 0.0, %v951
  %953 = vmatmul.bf16.gmra.mxu0 %v418
  %v954 = vpop.f32.mrf.mxu0
  %v955 = vadd.f32 0.0, %v954
  %v956 = vpop.f32.mrf.mxu0
  %v957 = vadd.f32 0.0, %v956
  %958 = vmatmul.bf16.gmra.mxu0 %v420
  %v959 = vpop.f32.mrf.mxu0
  %v960 = vadd.f32 0.0, %v959
  %v961 = vpop.f32.mrf.mxu0
  %v962 = vadd.f32 0.0, %v961
  %963 = vmatmul.bf16.gmra.mxu0 %v422
  %v964 = vpop.f32.mrf.mxu0
  %v965 = vadd.f32 0.0, %v964
  %v966 = vpop.f32.mrf.mxu0
  %v967 = vadd.f32 0.0, %v966
  %968 = vmatmul.bf16.gmra.mxu0 %v424
  %v969 = vpop.f32.mrf.mxu0
  %v970 = vadd.f32 0.0, %v969
  %v971 = vpop.f32.mrf.mxu0
  %v972 = vadd.f32 0.0, %v971
  %973 = vmatmul.bf16.gmra.mxu0 %v426
  %v974 = vpop.f32.mrf.mxu0
  %v975 = vadd.f32 0.0, %v974
  %v976 = vpop.f32.mrf.mxu0
  %v977 = vadd.f32 0.0, %v976
  %978 = vmatmul.bf16.gmra.mxu0 %v428
  %v979 = vpop.f32.mrf.mxu0
  %v980 = vadd.f32 0.0, %v979
  %v981 = vpop.f32.mrf.mxu0
  %v982 = vadd.f32 0.0, %v981
  %983 = vmatmul.bf16.gmra.mxu0 %v430
  %v984 = vpop.f32.mrf.mxu0
  %v985 = vadd.f32 0.0, %v984
  %v986 = vpop.f32.mrf.mxu0
  %v987 = vadd.f32 0.0, %v986
  %988 = vmatmul.bf16.gmra.mxu0 %v432
  %v989 = vpop.f32.mrf.mxu0
  %v990 = vadd.f32 0.0, %v989
  %v991 = vpop.f32.mrf.mxu0
  %v992 = vadd.f32 0.0, %v991
  %993 = vmatmul.bf16.gmra.mxu0 %v434
  %v994 = vpop.f32.mrf.mxu0
  %v995 = vadd.f32 0.0, %v994
  %v996 = vpop.f32.mrf.mxu0
  %v997 = vadd.f32 0.0, %v996
  %998 = vdwg.mxu0
  %999 = vmatpush.bf16.msra.mxu0 %v909
  %1000 = vmatpush.bf16.msra.mxu0 %v908
  %1001 = vmatpush.bf16.msra.mxu0 %v907
  %1002 = vmatpush.bf16.msra.mxu0 %v906
  %1003 = vmatpush.bf16.msra.mxu0 %v905
  %1004 = vmatpush.bf16.msra.mxu0 %v904
  %1005 = vmatpush.bf16.msra.mxu0 %v903
  %1006 = vmatpush.bf16.msra.mxu0 %v902
  %1007 = vmatmul.bf16.gmra.mxu0 %v405
  %v1008 = vpop.f32.mrf.mxu0
  %v1009 = vadd.f32 %v920, %v1008
  %v1010 = vpop.f32.mrf.mxu0
  %v1011 = vadd.f32 %v922, %v1010
  %1012 = vmatmul.bf16.gmra.mxu0 %v407
  %v1013 = vpop.f32.mrf.mxu0
  %v1014 = vadd.f32 %v925, %v1013
  %v1015 = vpop.f32.mrf.mxu0
  %v1016 = vadd.f32 %v927, %v1015
  %1017 = vmatmul.bf16.gmra.mxu0 %v409
  %v1018 = vpop.f32.mrf.mxu0
  %v1019 = vadd.f32 %v930, %v1018
  %v1020 = vpop.f32.mrf.mxu0
  %v1021 = vadd.f32 %v932, %v1020
  %1022 = vmatmul.bf16.gmra.mxu0 %v411
  %v1023 = vpop.f32.mrf.mxu0
  %v1024 = vadd.f32 %v935, %v1023
  %v1025 = vpop.f32.mrf.mxu0
  %v1026 = vadd.f32 %v937, %v1025
  %1027 = vmatmul.bf16.gmra.mxu0 %v413
  %v1028 = vpop.f32.mrf.mxu0
  %v1029 = vadd.f32 %v940, %v1028
  %v1030 = vpop.f32.mrf.mxu0
  %v1031 = vadd.f32 %v942, %v1030
  %1032 = vmatmul.bf16.gmra.mxu0 %v415
  %v1033 = vpop.f32.mrf.mxu0
  %v1034 = vadd.f32 %v945, %v1033
  %v1035 = vpop.f32.mrf.mxu0
  %v1036 = vadd.f32 %v947, %v1035
  %1037 = vmatmul.bf16.gmra.mxu0 %v417
  %v1038 = vpop.f32.mrf.mxu0
  %v1039 = vadd.f32 %v950, %v1038
  %v1040 = vpop.f32.mrf.mxu0
  %v1041 = vadd.f32 %v952, %v1040
  %1042 = vmatmul.bf16.gmra.mxu0 %v419
  %v1043 = vpop.f32.mrf.mxu0
  %v1044 = vadd.f32 %v955, %v1043
  %v1045 = vpop.f32.mrf.mxu0
  %v1046 = vadd.f32 %v957, %v1045
  %1047 = vmatmul.bf16.gmra.mxu0 %v421
  %v1048 = vpop.f32.mrf.mxu0
  %v1049 = vadd.f32 %v960, %v1048
  %v1050 = vpop.f32.mrf.mxu0
  %v1051 = vadd.f32 %v962, %v1050
  %1052 = vmatmul.bf16.gmra.mxu0 %v423
  %v1053 = vpop.f32.mrf.mxu0
  %v1054 = vadd.f32 %v965, %v1053
  %v1055 = vpop.f32.mrf.mxu0
  %v1056 = vadd.f32 %v967, %v1055
  %1057 = vmatmul.bf16.gmra.mxu0 %v425
  %v1058 = vpop.f32.mrf.mxu0
  %v1059 = vadd.f32 %v970, %v1058
  %v1060 = vpop.f32.mrf.mxu0
  %v1061 = vadd.f32 %v972, %v1060
  %1062 = vmatmul.bf16.gmra.mxu0 %v427
  %v1063 = vpop.f32.mrf.mxu0
  %v1064 = vadd.f32 %v975, %v1063
  %v1065 = vpop.f32.mrf.mxu0
  %v1066 = vadd.f32 %v977, %v1065
  %1067 = vmatmul.bf16.gmra.mxu0 %v429
  %v1068 = vpop.f32.mrf.mxu0
  %v1069 = vadd.f32 %v980, %v1068
  %v1070 = vpop.f32.mrf.mxu0
  %v1071 = vadd.f32 %v982, %v1070
  %1072 = vmatmul.bf16.gmra.mxu0 %v431
  %v1073 = vpop.f32.mrf.mxu0
  %v1074 = vadd.f32 %v985, %v1073
  %v1075 = vpop.f32.mrf.mxu0
  %v1076 = vadd.f32 %v987, %v1075
  %1077 = vmatmul.bf16.gmra.mxu0 %v433
  %v1078 = vpop.f32.mrf.mxu0
  %v1079 = vadd.f32 %v990, %v1078
  %v1080 = vpop.f32.mrf.mxu0
  %v1081 = vadd.f32 %v992, %v1080
  %1082 = vmatmul.bf16.gmra.mxu0 %v435
  %v1083 = vpop.f32.mrf.mxu0
  %v1084 = vadd.f32 %v995, %v1083
  %v1085 = vpop.f32.mrf.mxu0
  %v1086 = vadd.f32 %v997, %v1085
  %1087 = vdwg.mxu0
  %v1088 = vmax.f32 %v1009, 0.0
  %v1089 = vmax.f32 %v1011, 0.0
  %v1090 = vmax.f32 %v1014, 0.0
  %v1091 = vmax.f32 %v1016, 0.0
  %v1092 = vmax.f32 %v1019, 0.0
  %v1093 = vmax.f32 %v1021, 0.0
  %v1094 = vmax.f32 %v1024, 0.0
  %v1095 = vmax.f32 %v1026, 0.0
  %v1096 = vmax.f32 %v1029, 0.0
  %v1097 = vmax.f32 %v1031, 0.0
  %v1098 = vmax.f32 %v1034, 0.0
  %v1099 = vmax.f32 %v1036, 0.0
  %v1100 = vmax.f32 %v1039, 0.0
  %v1101 = vmax.f32 %v1041, 0.0
  %v1102 = vmax.f32 %v1044, 0.0
  %v1103 = vmax.f32 %v1046, 0.0
  %v1104 = vmax.f32 %v1049, 0.0
  %v1105 = vmax.f32 %v1051, 0.0
  %v1106 = vmax.f32 %v1054, 0.0
  %v1107 = vmax.f32 %v1056, 0.0
  %v1108 = vmax.f32 %v1059, 0.0
  %v1109 = vmax.f32 %v1061, 0.0
  %v1110 = vmax.f32 %v1064, 0.0
  %v1111 = vmax.f32 %v1066, 0.0
  %v1112 = vmax.f32 %v1069, 0.0
  %v1113 = vmax.f32 %v1071, 0.0
  %v1114 = vmax.f32 %v1074, 0.0
  %v1115 = vmax.f32 %v1076, 0.0
  %v1116 = vmax.f32 %v1079, 0.0
  %v1117 = vmax.f32 %v1081, 0.0
  %v1118 = vmax.f32 %v1084, 0.0
  %v1119 = vmax.f32 %v1086, 0.0
  %v1120 = vld [vmem:[%s2 + $0x40] sm:$0xff]
  %v1121 = vld [vmem:[%s2 + $0x48] sm:$0xff]
  %v1122 = vld [vmem:[%s2 + $0x50] sm:$0xff]
  %v1123 = vld [vmem:[%s2 + $0x58] sm:$0xff]
  %v1124 = vld [vmem:[%s2 + $0x60] sm:$0x1]
  %v1125 = vperm.slane %v1124, 0
  %v1127 = vsel %vm684, %v1088, 0
  %v1130 = vsel %vm684, %v1089, 0
  %v1133 = vsel %vm684, %v1090, 0
  %v1136 = vsel %vm684, %v1091, 0
  %v1139 = vsel %vm684, %v1092, 0
  %v1142 = vsel %vm684, %v1093, 0
  %v1145 = vsel %vm684, %v1094, 0
  %v1148 = vsel %vm684, %v1095, 0
  %v1151 = vsel %vm684, %v1096, 0
  %v1154 = vsel %vm684, %v1097, 0
  %v1157 = vsel %vm684, %v1098, 0
  %v1160 = vsel %vm684, %v1099, 0
  %v1163 = vsel %vm684, %v1100, 0
  %v1166 = vsel %vm684, %v1101, 0
  %v1169 = vsel %vm684, %v1102, 0
  %v1172 = vsel %vm684, %v1103, 0
  %v1175 = vsel %vm684, %v1104, 0
  %v1178 = vsel %vm684, %v1105, 0
  %v1181 = vsel %vm684, %v1106, 0
  %v1184 = vsel %vm684, %v1107, 0
  %v1187 = vsel %vm684, %v1108, 0
  %v1190 = vsel %vm684, %v1109, 0
  %v1193 = vsel %vm684, %v1110, 0
  %v1196 = vsel %vm684, %v1111, 0
  %v1199 = vsel %vm684, %v1112, 0
  %v1202 = vsel %vm684, %v1113, 0
  %v1205 = vsel %vm684, %v1114, 0
  %v1208 = vsel %vm684, %v1115, 0
  %v1211 = vsel %vm684, %v1116, 0
  %v1214 = vsel %vm684, %v1117, 0
  %v1217 = vsel %vm684, %v1118, 0
  %v1220 = vsel %vm684, %v1119, 0
  %1222 = vmatpush.msra.mxu0 0.0
  %1223 = vmatpush.msra.mxu0 0.0
  %1224 = vmatpush.msra.mxu0 0.0
  %1225 = vmatpush.msra.mxu0 0.0
  %1226 = vmatpush.msra.mxu0 0.0
  %1227 = vmatpush.msra.mxu0 0.0
  %1228 = vmatpush.msra.mxu0 0.0
  %1229 = vmatpush.msra.mxu0 0.0
  %1230 = vmatpush.msra.mxu0 0.0
  %1231 = vmatpush.msra.mxu0 0.0
  %1232 = vmatpush.msra.mxu0 0.0
  %1233 = vmatpush.msra.mxu0 0.0
  %1234 = vmatpush.msra.mxu0 %v1123
  %1235 = vmatpush.msra.mxu0 %v1122
  %1236 = vmatpush.msra.mxu0 %v1121
  %1237 = vmatpush.msra.mxu0 %v1120
  %1238 = vmatmul.f32.gmra.mxu0 %v1127
  %v1239 = vpop.f32.mrf.mxu0
  %v1240 = vadd.f32 %v1125, %v1239
  %1241 = vmatmul.f32.gmra.mxu0 %v1130
  %v1242 = vpop.f32.mrf.mxu0
  %v1243 = vadd.f32 %v1125, %v1242
  %1244 = vmatmul.f32.gmra.mxu0 %v1133
  %v1245 = vpop.f32.mrf.mxu0
  %v1246 = vadd.f32 %v1125, %v1245
  %1247 = vmatmul.f32.gmra.mxu0 %v1136
  %v1248 = vpop.f32.mrf.mxu0
  %v1249 = vadd.f32 %v1125, %v1248
  %1250 = vmatmul.f32.gmra.mxu0 %v1139
  %v1251 = vpop.f32.mrf.mxu0
  %v1252 = vadd.f32 %v1125, %v1251
  %1253 = vmatmul.f32.gmra.mxu0 %v1142
  %v1254 = vpop.f32.mrf.mxu0
  %v1255 = vadd.f32 %v1125, %v1254
  %1256 = vmatmul.f32.gmra.mxu0 %v1145
  %v1257 = vpop.f32.mrf.mxu0
  %v1258 = vadd.f32 %v1125, %v1257
  %1259 = vmatmul.f32.gmra.mxu0 %v1148
  %v1260 = vpop.f32.mrf.mxu0
  %v1261 = vadd.f32 %v1125, %v1260
  %1262 = vmatmul.f32.gmra.mxu0 %v1151
  %v1263 = vpop.f32.mrf.mxu0
  %v1264 = vadd.f32 %v1125, %v1263
  %1265 = vmatmul.f32.gmra.mxu0 %v1154
  %v1266 = vpop.f32.mrf.mxu0
  %v1267 = vadd.f32 %v1125, %v1266
  %1268 = vmatmul.f32.gmra.mxu0 %v1157
  %v1269 = vpop.f32.mrf.mxu0
  %v1270 = vadd.f32 %v1125, %v1269
  %1271 = vmatmul.f32.gmra.mxu0 %v1160
  %v1272 = vpop.f32.mrf.mxu0
  %v1273 = vadd.f32 %v1125, %v1272
  %1274 = vmatmul.f32.gmra.mxu0 %v1163
  %v1275 = vpop.f32.mrf.mxu0
  %v1276 = vadd.f32 %v1125, %v1275
  %1277 = vmatmul.f32.gmra.mxu0 %v1166
  %v1278 = vpop.f32.mrf.mxu0
  %v1279 = vadd.f32 %v1125, %v1278
  %1280 = vmatmul.f32.gmra.mxu0 %v1169
  %v1281 = vpop.f32.mrf.mxu0
  %v1282 = vadd.f32 %v1125, %v1281
  %1283 = vmatmul.f32.gmra.mxu0 %v1172
  %v1284 = vpop.f32.mrf.mxu0
  %v1285 = vadd.f32 %v1125, %v1284
  %1286 = vmatmul.f32.gmra.mxu0 %v1175
  %v1287 = vpop.f32.mrf.mxu0
  %v1288 = vadd.f32 %v1125, %v1287
  %1289 = vmatmul.f32.gmra.mxu0 %v1178
  %v1290 = vpop.f32.mrf.mxu0
  %v1291 = vadd.f32 %v1125, %v1290
  %1292 = vmatmul.f32.gmra.mxu0 %v1181
  %v1293 = vpop.f32.mrf.mxu0
  %v1294 = vadd.f32 %v1125, %v1293
  %1295 = vmatmul.f32.gmra.mxu0 %v1184
  %v1296 = vpop.f32.mrf.mxu0
  %v1297 = vadd.f32 %v1125, %v1296
  %1298 = vmatmul.f32.gmra.mxu0 %v1187
  %v1299 = vpop.f32.mrf.mxu0
  %v1300 = vadd.f32 %v1125, %v1299
  %1301 = vmatmul.f32.gmra.mxu0 %v1190
  %v1302 = vpop.f32.mrf.mxu0
  %v1303 = vadd.f32 %v1125, %v1302
  %1304 = vmatmul.f32.gmra.mxu0 %v1193
  %v1305 = vpop.f32.mrf.mxu0
  %v1306 = vadd.f32 %v1125, %v1305
  %1307 = vmatmul.f32.gmra.mxu0 %v1196
  %v1308 = vpop.f32.mrf.mxu0
  %v1309 = vadd.f32 %v1125, %v1308
  %1310 = vmatmul.f32.gmra.mxu0 %v1199
  %v1311 = vpop.f32.mrf.mxu0
  %v1312 = vadd.f32 %v1125, %v1311
  %1313 = vmatmul.f32.gmra.mxu0 %v1202
  %v1314 = vpop.f32.mrf.mxu0
  %v1315 = vadd.f32 %v1125, %v1314
  %1316 = vmatmul.f32.gmra.mxu0 %v1205
  %v1317 = vpop.f32.mrf.mxu0
  %v1318 = vadd.f32 %v1125, %v1317
  %1319 = vmatmul.f32.gmra.mxu0 %v1208
  %v1320 = vpop.f32.mrf.mxu0
  %v1321 = vadd.f32 %v1125, %v1320
  %1322 = vmatmul.f32.gmra.mxu0 %v1211
  %v1323 = vpop.f32.mrf.mxu0
  %v1324 = vadd.f32 %v1125, %v1323
  %1325 = vmatmul.f32.gmra.mxu0 %v1214
  %v1326 = vpop.f32.mrf.mxu0
  %v1327 = vadd.f32 %v1125, %v1326
  %1328 = vmatmul.f32.gmra.mxu0 %v1217
  %v1329 = vpop.f32.mrf.mxu0
  %v1330 = vadd.f32 %v1125, %v1329
  %1331 = vmatmul.f32.gmra.mxu0 %v1220
  %v1332 = vpop.f32.mrf.mxu0
  %v1333 = vadd.f32 %v1125, %v1332
  %1334 = vdwg.mxu0
  %v1335 = vpack.c.bf16 %v1243, %v1240
  %v1336 = vpack.c.bf16 %v1249, %v1246
  %v1337 = vpack.c.bf16 %v1255, %v1252
  %v1338 = vpack.c.bf16 %v1261, %v1258
  %v1339 = vpack.c.bf16 %v1267, %v1264
  %v1340 = vpack.c.bf16 %v1273, %v1270
  %v1341 = vpack.c.bf16 %v1279, %v1276
  %v1342 = vpack.c.bf16 %v1285, %v1282
  %v1343 = vpack.c.bf16 %v1291, %v1288
  %v1344 = vpack.c.bf16 %v1297, %v1294
  %v1345 = vpack.c.bf16 %v1303, %v1300
  %v1346 = vpack.c.bf16 %v1309, %v1306
  %v1347 = vpack.c.bf16 %v1315, %v1312
  %v1348 = vpack.c.bf16 %v1321, %v1318
  %v1349 = vpack.c.bf16 %v1327, %v1324
  %v1350 = vpack.c.bf16 %v1333, %v1330
  %1351 = vmatpush.bf16.msra.mxu0 %v1342
  %1352 = vmatpush.bf16.msra.mxu0 %v1341
  %1353 = vmatpush.bf16.msra.mxu0 %v1340
  %1354 = vmatpush.bf16.msra.mxu0 %v1339
  %1355 = vmatpush.bf16.msra.mxu0 %v1338
  %1356 = vmatpush.bf16.msra.mxu0 %v1337
  %1357 = vmatpush.bf16.msra.mxu0 %v1336
  %1358 = vmatpush.bf16.msra.mxu0 %v1335
  %1359 = vmatmul.bf16.gmra.mxu0 %v404
  %v1360 = vpop.f32.mrf.mxu0
  %v1361 = vadd.f32 0.0, %v1360
  %v1362 = vpop.f32.mrf.mxu0
  %v1363 = vadd.f32 0.0, %v1362
  %1364 = vmatmul.bf16.gmra.mxu0 %v406
  %v1365 = vpop.f32.mrf.mxu0
  %v1366 = vadd.f32 0.0, %v1365
  %v1367 = vpop.f32.mrf.mxu0
  %v1368 = vadd.f32 0.0, %v1367
  %1369 = vmatmul.bf16.gmra.mxu0 %v408
  %v1370 = vpop.f32.mrf.mxu0
  %v1371 = vadd.f32 0.0, %v1370
  %v1372 = vpop.f32.mrf.mxu0
  %v1373 = vadd.f32 0.0, %v1372
  %1374 = vmatmul.bf16.gmra.mxu0 %v410
  %v1375 = vpop.f32.mrf.mxu0
  %v1376 = vadd.f32 0.0, %v1375
  %v1377 = vpop.f32.mrf.mxu0
  %v1378 = vadd.f32 0.0, %v1377
  %1379 = vmatmul.bf16.gmra.mxu0 %v412
  %v1380 = vpop.f32.mrf.mxu0
  %v1381 = vadd.f32 0.0, %v1380
  %v1382 = vpop.f32.mrf.mxu0
  %v1383 = vadd.f32 0.0, %v1382
  %1384 = vmatmul.bf16.gmra.mxu0 %v414
  %v1385 = vpop.f32.mrf.mxu0
  %v1386 = vadd.f32 0.0, %v1385
  %v1387 = vpop.f32.mrf.mxu0
  %v1388 = vadd.f32 0.0, %v1387
  %1389 = vmatmul.bf16.gmra.mxu0 %v416
  %v1390 = vpop.f32.mrf.mxu0
  %v1391 = vadd.f32 0.0, %v1390
  %v1392 = vpop.f32.mrf.mxu0
  %v1393 = vadd.f32 0.0, %v1392
  %1394 = vmatmul.bf16.gmra.mxu0 %v418
  %v1395 = vpop.f32.mrf.mxu0
  %v1396 = vadd.f32 0.0, %v1395
  %v1397 = vpop.f32.mrf.mxu0
  %v1398 = vadd.f32 0.0, %v1397
  %1399 = vmatmul.bf16.gmra.mxu0 %v420
  %v1400 = vpop.f32.mrf.mxu0
  %v1401 = vadd.f32 0.0, %v1400
  %v1402 = vpop.f32.mrf.mxu0
  %v1403 = vadd.f32 0.0, %v1402
  %1404 = vmatmul.bf16.gmra.mxu0 %v422
  %v1405 = vpop.f32.mrf.mxu0
  %v1406 = vadd.f32 0.0, %v1405
  %v1407 = vpop.f32.mrf.mxu0
  %v1408 = vadd.f32 0.0, %v1407
  %1409 = vmatmul.bf16.gmra.mxu0 %v424
  %v1410 = vpop.f32.mrf.mxu0
  %v1411 = vadd.f32 0.0, %v1410
  %v1412 = vpop.f32.mrf.mxu0
  %v1413 = vadd.f32 0.0, %v1412
  %1414 = vmatmul.bf16.gmra.mxu0 %v426
  %v1415 = vpop.f32.mrf.mxu0
  %v1416 = vadd.f32 0.0, %v1415
  %v1417 = vpop.f32.mrf.mxu0
  %v1418 = vadd.f32 0.0, %v1417
  %1419 = vmatmul.bf16.gmra.mxu0 %v428
  %v1420 = vpop.f32.mrf.mxu0
  %v1421 = vadd.f32 0.0, %v1420
  %v1422 = vpop.f32.mrf.mxu0
  %v1423 = vadd.f32 0.0, %v1422
  %1424 = vmatmul.bf16.gmra.mxu0 %v430
  %v1425 = vpop.f32.mrf.mxu0
  %v1426 = vadd.f32 0.0, %v1425
  %v1427 = vpop.f32.mrf.mxu0
  %v1428 = vadd.f32 0.0, %v1427
  %1429 = vmatmul.bf16.gmra.mxu0 %v432
  %v1430 = vpop.f32.mrf.mxu0
  %v1431 = vadd.f32 0.0, %v1430
  %v1432 = vpop.f32.mrf.mxu0
  %v1433 = vadd.f32 0.0, %v1432
  %1434 = vmatmul.bf16.gmra.mxu0 %v434
  %v1435 = vpop.f32.mrf.mxu0
  %v1436 = vadd.f32 0.0, %v1435
  %v1437 = vpop.f32.mrf.mxu0
  %v1438 = vadd.f32 0.0, %v1437
  %1439 = vdwg.mxu0
  %1440 = vmatpush.bf16.msra.mxu0 %v1350
  %1441 = vmatpush.bf16.msra.mxu0 %v1349
  %1442 = vmatpush.bf16.msra.mxu0 %v1348
  %1443 = vmatpush.bf16.msra.mxu0 %v1347
  %1444 = vmatpush.bf16.msra.mxu0 %v1346
  %1445 = vmatpush.bf16.msra.mxu0 %v1345
  %1446 = vmatpush.bf16.msra.mxu0 %v1344
  %1447 = vmatpush.bf16.msra.mxu0 %v1343
  %1448 = vmatmul.bf16.gmra.mxu0 %v405
  %v1449 = vpop.f32.mrf.mxu0
  %v1450 = vadd.f32 %v1361, %v1449
  %v1451 = vpop.f32.mrf.mxu0
  %v1452 = vadd.f32 %v1363, %v1451
  %1453 = vmatmul.bf16.gmra.mxu0 %v407
  %v1454 = vpop.f32.mrf.mxu0
  %v1455 = vadd.f32 %v1366, %v1454
  %v1456 = vpop.f32.mrf.mxu0
  %v1457 = vadd.f32 %v1368, %v1456
  %1458 = vmatmul.bf16.gmra.mxu0 %v409
  %v1459 = vpop.f32.mrf.mxu0
  %v1460 = vadd.f32 %v1371, %v1459
  %v1461 = vpop.f32.mrf.mxu0
  %v1462 = vadd.f32 %v1373, %v1461
  %1463 = vmatmul.bf16.gmra.mxu0 %v411
  %v1464 = vpop.f32.mrf.mxu0
  %v1465 = vadd.f32 %v1376, %v1464
  %v1466 = vpop.f32.mrf.mxu0
  %v1467 = vadd.f32 %v1378, %v1466
  %1468 = vmatmul.bf16.gmra.mxu0 %v413
  %v1469 = vpop.f32.mrf.mxu0
  %v1470 = vadd.f32 %v1381, %v1469
  %v1471 = vpop.f32.mrf.mxu0
  %v1472 = vadd.f32 %v1383, %v1471
  %1473 = vmatmul.bf16.gmra.mxu0 %v415
  %v1474 = vpop.f32.mrf.mxu0
  %v1475 = vadd.f32 %v1386, %v1474
  %v1476 = vpop.f32.mrf.mxu0
  %v1477 = vadd.f32 %v1388, %v1476
  %1478 = vmatmul.bf16.gmra.mxu0 %v417
  %v1479 = vpop.f32.mrf.mxu0
  %v1480 = vadd.f32 %v1391, %v1479
  %v1481 = vpop.f32.mrf.mxu0
  %v1482 = vadd.f32 %v1393, %v1481
  %1483 = vmatmul.bf16.gmra.mxu0 %v419
  %v1484 = vpop.f32.mrf.mxu0
  %v1485 = vadd.f32 %v1396, %v1484
  %v1486 = vpop.f32.mrf.mxu0
  %v1487 = vadd.f32 %v1398, %v1486
  %1488 = vmatmul.bf16.gmra.mxu0 %v421
  %v1489 = vpop.f32.mrf.mxu0
  %v1490 = vadd.f32 %v1401, %v1489
  %v1491 = vpop.f32.mrf.mxu0
  %v1492 = vadd.f32 %v1403, %v1491
  %1493 = vmatmul.bf16.gmra.mxu0 %v423
  %v1494 = vpop.f32.mrf.mxu0
  %v1495 = vadd.f32 %v1406, %v1494
  %v1496 = vpop.f32.mrf.mxu0
  %v1497 = vadd.f32 %v1408, %v1496
  %1498 = vmatmul.bf16.gmra.mxu0 %v425
  %v1499 = vpop.f32.mrf.mxu0
  %v1500 = vadd.f32 %v1411, %v1499
  %v1501 = vpop.f32.mrf.mxu0
  %v1502 = vadd.f32 %v1413, %v1501
  %1503 = vmatmul.bf16.gmra.mxu0 %v427
  %v1504 = vpop.f32.mrf.mxu0
  %v1505 = vadd.f32 %v1416, %v1504
  %v1506 = vpop.f32.mrf.mxu0
  %v1507 = vadd.f32 %v1418, %v1506
  %1508 = vmatmul.bf16.gmra.mxu0 %v429
  %v1509 = vpop.f32.mrf.mxu0
  %v1510 = vadd.f32 %v1421, %v1509
  %v1511 = vpop.f32.mrf.mxu0
  %v1512 = vadd.f32 %v1423, %v1511
  %1513 = vmatmul.bf16.gmra.mxu0 %v431
  %v1514 = vpop.f32.mrf.mxu0
  %v1515 = vadd.f32 %v1426, %v1514
  %v1516 = vpop.f32.mrf.mxu0
  %v1517 = vadd.f32 %v1428, %v1516
  %1518 = vmatmul.bf16.gmra.mxu0 %v433
  %v1519 = vpop.f32.mrf.mxu0
  %v1520 = vadd.f32 %v1431, %v1519
  %v1521 = vpop.f32.mrf.mxu0
  %v1522 = vadd.f32 %v1433, %v1521
  %1523 = vmatmul.bf16.gmra.mxu0 %v435
  %v1524 = vpop.f32.mrf.mxu0
  %v1525 = vadd.f32 %v1436, %v1524
  %v1526 = vpop.f32.mrf.mxu0
  %v1527 = vadd.f32 %v1438, %v1526
  %1528 = vdwg.mxu0
  %1529 = vst [vmem:[%s3] sm:$0xff] %v1450
  %1530 = vst [vmem:[%s3 + $0x8] sm:$0xff] %v1452
  %1531 = vst [vmem:[%s3 + $0x10] sm:$0xff] %v1455
  %1532 = vst [vmem:[%s3 + $0x18] sm:$0xff] %v1457
  %1533 = vst [vmem:[%s3 + $0x20] sm:$0xff] %v1460
  %1534 = vst [vmem:[%s3 + $0x28] sm:$0xff] %v1462
  %1535 = vst [vmem:[%s3 + $0x30] sm:$0xff] %v1465
  %1536 = vst [vmem:[%s3 + $0x38] sm:$0xff] %v1467
  %1537 = vst [vmem:[%s3 + $0x40] sm:$0xff] %v1470
  %1538 = vst [vmem:[%s3 + $0x48] sm:$0xff] %v1472
  %1539 = vst [vmem:[%s3 + $0x50] sm:$0xff] %v1475
  %1540 = vst [vmem:[%s3 + $0x58] sm:$0xff] %v1477
  %1541 = vst [vmem:[%s3 + $0x60] sm:$0xff] %v1480
  %1542 = vst [vmem:[%s3 + $0x68] sm:$0xff] %v1482
  %1543 = vst [vmem:[%s3 + $0x70] sm:$0xff] %v1485
  %1544 = vst [vmem:[%s3 + $0x78] sm:$0xff] %v1487
  %1545 = vst [vmem:[%s3 + $0x80] sm:$0xff] %v1490
  %1546 = vst [vmem:[%s3 + $0x88] sm:$0xff] %v1492
  %1547 = vst [vmem:[%s3 + $0x90] sm:$0xff] %v1495
  %1548 = vst [vmem:[%s3 + $0x98] sm:$0xff] %v1497
  %1549 = vst [vmem:[%s3 + $0xa0] sm:$0xff] %v1500
  %1550 = vst [vmem:[%s3 + $0xa8] sm:$0xff] %v1502
  %1551 = vst [vmem:[%s3 + $0xb0] sm:$0xff] %v1505
  %1552 = vst [vmem:[%s3 + $0xb8] sm:$0xff] %v1507
  %1553 = vst [vmem:[%s3 + $0xc0] sm:$0xff] %v1510
  %1554 = vst [vmem:[%s3 + $0xc8] sm:$0xff] %v1512
  %1555 = vst [vmem:[%s3 + $0xd0] sm:$0xff] %v1515
  %1556 = vst [vmem:[%s3 + $0xd8] sm:$0xff] %v1517
  %1557 = vst [vmem:[%s3 + $0xe0] sm:$0xff] %v1520
  %1558 = vst [vmem:[%s3 + $0xe8] sm:$0xff] %v1522
  %1559 = vst [vmem:[%s3 + $0xf0] sm:$0xff] %v1525
  %1560 = vst [vmem:[%s3 + $0xf8] sm:$0xff] %v1527
  // Predicated region
  $region14: #{forward.1} parent=0 // pred_check
    _
  $region15: #{forward.1} parent=0 // pred_check_branch
    %1562 = sbr.rel (0) target = $region17
  $region16: #{forward.1} parent=0 // pred_region
    _
  $region17: #{forward.1} parent=0 // pred_fallthru
    _
  // Predicated region
  $region18: #{forward.1} parent=0 // pred_check
    _
  $region19: #{forward.1} parent=0 // pred_check_branch
    %1564 = sbr.rel (0) target = $region21
  $region20: #{forward.1} parent=0 // pred_region
    _
  $region21: #{forward.1} parent=0 // pred_fallthru
    _

// kernel: forward.1
$region0: #{forward.1}
  #allocation0 [shape = 'u32[]', space=smem, size = 0x4, offset = 0x4, fixed_abs, tag = 'smem constant byte address 0x4 - core index']
  #allocation1 [shape = 'u32[72,128]{1,0:T(1,128)}', space=vmem, size = 0x9000, scoped, tag = 'internal scratch']
  %s0 = inlined_call_operand.vmem [shape: bf16[256,256], index: 0, kind: input, shape index: {}]
  %s1 = inlined_call_operand.vmem [shape: f32[256,16], index: 1, kind: input, shape index: {}]
  %s2 = inlined_call_operand.vmem [shape: f32[104,128], index: 2, kind: input, shape index: {}]
  %s3 = inlined_call_operand.vmem [shape: f32[256,128], index: 3, kind: output, shape index: {}]
  %s4 = sld [smem:[#allocation0]]
  $region22: #{forward.1} parent=0
    _
  %s6 = ssub.s32 1, %s4
  %s7 = scalar_select 0, %s6, %s4
  // Predicated region
  $region2: #{forward.1} parent=0 // pred_check
    _
  $region3: #{forward.1} parent=0 // pred_check_branch
    %9 = sbr.rel (0) target = $region5
  $region4: #{forward.1} parent=0 // pred_region
    _
  $region5: #{forward.1} parent=0 // pred_fallthru
    _
  // Predicated region
  $region6: #{forward.1} parent=0 // pred_check
    _
  $region7: #{forward.1} parent=0 // pred_check_branch
    %11 = sbr.rel (0) target = $region9
  $region8: #{forward.1} parent=0 // pred_region
    _
  $region9: #{forward.1} parent=0 // pred_fallthru
    _
  // Predicated region
  $region10: #{forward.1} parent=0 // pred_check
    _
  $region11: #{forward.1} parent=0 // pred_check_branch
    %13 = sbr.rel (0) target = $region13
  $region12: #{forward.1} parent=0 // pred_region
    _
  $region13: #{forward.1} parent=0 // pred_fallthru
    _
  %v14 = vld [vmem:[%s1] sm:$0xff]
  %v15 = vld [vmem:[%s1 + $0x8] sm:$0xff]
  %v16 = vld [vmem:[%s1 + $0x10] sm:$0xff]
  %v17 = vld [vmem:[%s1 + $0x18] sm:$0xff]
  %v18 = vld [vmem:[%s1 + $0x20] sm:$0xff]
  %v19 = vld [vmem:[%s1 + $0x28] sm:$0xff]
  %v20 = vld [vmem:[%s1 + $0x30] sm:$0xff]
  %v21 = vld [vmem:[%s1 + $0x38] sm:$0xff]
  %v22 = vld [vmem:[%s1 + $0x40] sm:$0xff]
  %v23 = vld [vmem:[%s1 + $0x48] sm:$0xff]
  %v24 = vld [vmem:[%s1 + $0x50] sm:$0xff]
  %v25 = vld [vmem:[%s1 + $0x58] sm:$0xff]
  %v26 = vld [vmem:[%s1 + $0x60] sm:$0xff]
  %v27 = vld [vmem:[%s1 + $0x68] sm:$0xff]
  %v28 = vld [vmem:[%s1 + $0x70] sm:$0xff]
  %v29 = vld [vmem:[%s1 + $0x78] sm:$0xff]
  %v30 = vld [vmem:[%s1 + $0x80] sm:$0xff]
  %v31 = vld [vmem:[%s1 + $0x88] sm:$0xff]
  %v32 = vld [vmem:[%s1 + $0x90] sm:$0xff]
  %v33 = vld [vmem:[%s1 + $0x98] sm:$0xff]
  %v34 = vld [vmem:[%s1 + $0xa0] sm:$0xff]
  %v35 = vld [vmem:[%s1 + $0xa8] sm:$0xff]
  %v36 = vld [vmem:[%s1 + $0xb0] sm:$0xff]
  %v37 = vld [vmem:[%s1 + $0xb8] sm:$0xff]
  %v38 = vld [vmem:[%s1 + $0xc0] sm:$0xff]
  %v39 = vld [vmem:[%s1 + $0xc8] sm:$0xff]
  %v40 = vld [vmem:[%s1 + $0xd0] sm:$0xff]
  %v41 = vld [vmem:[%s1 + $0xd8] sm:$0xff]
  %v42 = vld [vmem:[%s1 + $0xe0] sm:$0xff]
  %v43 = vld [vmem:[%s1 + $0xe8] sm:$0xff]
  %v44 = vld [vmem:[%s1 + $0xf0] sm:$0xff]
  %v45 = vld [vmem:[%s1 + $0xf8] sm:$0xff]
  %v46 = vld [vmem:[%s2] sm:$0xff]
  %v47 = vld [vmem:[%s2 + $0x8] sm:$0xff]
  %v48 = vld [vmem:[%s2 + $0x10] sm:$0x1]
  %v49 = vperm.slane %v48, 0
  %vm50 = vcmask 130048
  %v52 = vsel %vm50, %v14, 0
  %v55 = vsel %vm50, %v15, 0
  %v58 = vsel %vm50, %v16, 0
  %v61 = vsel %vm50, %v17, 0
  %v64 = vsel %vm50, %v18, 0
  %v67 = vsel %vm50, %v19, 0
  %v70 = vsel %vm50, %v20, 0
  %v73 = vsel %vm50, %v21, 0
  %v76 = vsel %vm50, %v22, 0
  %v79 = vsel %vm50, %v23, 0
  %v82 = vsel %vm50, %v24, 0
  %v85 = vsel %vm50, %v25, 0
  %v88 = vsel %vm50, %v26, 0
  %v91 = vsel %vm50, %v27, 0
  %v94 = vsel %vm50, %v28, 0
  %v97 = vsel %vm50, %v29, 0
  %v100 = vsel %vm50, %v30, 0
  %v103 = vsel %vm50, %v31, 0
  %v106 = vsel %vm50, %v32, 0
  %v109 = vsel %vm50, %v33, 0
  %v112 = vsel %vm50, %v34, 0
  %v115 = vsel %vm50, %v35, 0
  %v118 = vsel %vm50, %v36, 0
  %v121 = vsel %vm50, %v37, 0
  %v124 = vsel %vm50, %v38, 0
  %v127 = vsel %vm50, %v39, 0
  %v130 = vsel %vm50, %v40, 0
  %v133 = vsel %vm50, %v41, 0
  %v136 = vsel %vm50, %v42, 0
  %v139 = vsel %vm50, %v43, 0
  %v142 = vsel %vm50, %v44, 0
  %v145 = vsel %vm50, %v45, 0
  %147 = vmatpush.msra.mxu0 0.0
  %148 = vmatpush.msra.mxu0 0.0
  %149 = vmatpush.msra.mxu0 0.0
  %150 = vmatpush.msra.mxu0 0.0
  %151 = vmatpush.msra.mxu0 0.0
  %152 = vmatpush.msra.mxu0 0.0
  %153 = vmatpush.msra.mxu0 0.0
  %154 = vmatpush.msra.mxu0 0.0
  %155 = vmatpush.msra.mxu0 0.0
  %156 = vmatpush.msra.mxu0 0.0
  %157 = vmatpush.msra.mxu0 0.0
  %158 = vmatpush.msra.mxu0 0.0
  %159 = vmatpush.msra.mxu0 0.0
  %160 = vmatpush.msra.mxu0 0.0
  %161 = vmatpush.msra.mxu0 %v47
  %162 = vmatpush.msra.mxu0 %v46
  %163 = vmatmul.f32.gmra.mxu0 %v52
  %v164 = vpop.f32.mrf.mxu0
  %v165 = vadd.f32 %v49, %v164
  %166 = vmatmul.f32.gmra.mxu0 %v55
  %v167 = vpop.f32.mrf.mxu0
  %v168 = vadd.f32 %v49, %v167
  %169 = vmatmul.f32.gmra.mxu0 %v58
  %v170 = vpop.f32.mrf.mxu0
  %v171 = vadd.f32 %v49, %v170
  %172 = vmatmul.f32.gmra.mxu0 %v61
  %v173 = vpop.f32.mrf.mxu0
  %v174 = vadd.f32 %v49, %v173
  %175 = vmatmul.f32.gmra.mxu0 %v64
  %v176 = vpop.f32.mrf.mxu0
  %v177 = vadd.f32 %v49, %v176
  %178 = vmatmul.f32.gmra.mxu0 %v67
  %v179 = vpop.f32.mrf.mxu0
  %v180 = vadd.f32 %v49, %v179
  %181 = vmatmul.f32.gmra.mxu0 %v70
  %v182 = vpop.f32.mrf.mxu0
  %v183 = vadd.f32 %v49, %v182
  %184 = vmatmul.f32.gmra.mxu0 %v73
  %v185 = vpop.f32.mrf.mxu0
  %v186 = vadd.f32 %v49, %v185
  %187 = vmatmul.f32.gmra.mxu0 %v76
  %v188 = vpop.f32.mrf.mxu0
  %v189 = vadd.f32 %v49, %v188
  %190 = vmatmul.f32.gmra.mxu0 %v79
  %v191 = vpop.f32.mrf.mxu0
  %v192 = vadd.f32 %v49, %v191
  %193 = vmatmul.f32.gmra.mxu0 %v82
  %v194 = vpop.f32.mrf.mxu0
  %v195 = vadd.f32 %v49, %v194
  %196 = vmatmul.f32.gmra.mxu0 %v85
  %v197 = vpop.f32.mrf.mxu0
  %v198 = vadd.f32 %v49, %v197
  %199 = vmatmul.f32.gmra.mxu0 %v88
  %v200 = vpop.f32.mrf.mxu0
  %v201 = vadd.f32 %v49, %v200
  %202 = vmatmul.f32.gmra.mxu0 %v91
  %v203 = vpop.f32.mrf.mxu0
  %v204 = vadd.f32 %v49, %v203
  %205 = vmatmul.f32.gmra.mxu0 %v94
  %v206 = vpop.f32.mrf.mxu0
  %v207 = vadd.f32 %v49, %v206
  %208 = vmatmul.f32.gmra.mxu0 %v97
  %v209 = vpop.f32.mrf.mxu0
  %v210 = vadd.f32 %v49, %v209
  %211 = vmatmul.f32.gmra.mxu0 %v100
  %v212 = vpop.f32.mrf.mxu0
  %v213 = vadd.f32 %v49, %v212
  %214 = vmatmul.f32.gmra.mxu0 %v103
  %v215 = vpop.f32.mrf.mxu0
  %v216 = vadd.f32 %v49, %v215
  %217 = vmatmul.f32.gmra.mxu0 %v106
  %v218 = vpop.f32.mrf.mxu0
  %v219 = vadd.f32 %v49, %v218
  %220 = vmatmul.f32.gmra.mxu0 %v109
  %v221 = vpop.f32.mrf.mxu0
  %v222 = vadd.f32 %v49, %v221
  %223 = vmatmul.f32.gmra.mxu0 %v112
  %v224 = vpop.f32.mrf.mxu0
  %v225 = vadd.f32 %v49, %v224
  %226 = vmatmul.f32.gmra.mxu0 %v115
  %v227 = vpop.f32.mrf.mxu0
  %v228 = vadd.f32 %v49, %v227
  %229 = vmatmul.f32.gmra.mxu0 %v118
  %v230 = vpop.f32.mrf.mxu0
  %v231 = vadd.f32 %v49, %v230
  %232 = vmatmul.f32.gmra.mxu0 %v121
  %v233 = vpop.f32.mrf.mxu0
  %v234 = vadd.f32 %v49, %v233
  %235 = vmatmul.f32.gmra.mxu0 %v124
  %v236 = vpop.f32.mrf.mxu0
  %v237 = vadd.f32 %v49, %v236
  %238 = vmatmul.f32.gmra.mxu0 %v127
  %v239 = vpop.f32.mrf.mxu0
  %v240 = vadd.f32 %v49, %v239
  %241 = vmatmul.f32.gmra.mxu0 %v130
  %v242 = vpop.f32.mrf.mxu0
  %v243 = vadd.f32 %v49, %v242
  %244 = vmatmul.f32.gmra.mxu0 %v133
  %v245 = vpop.f32.mrf.mxu0
  %v246 = vadd.f32 %v49, %v245
  %247 = vmatmul.f32.gmra.mxu0 %v136
  %v248 = vpop.f32.mrf.mxu0
  %v249 = vadd.f32 %v49, %v248
  %250 = vmatmul.f32.gmra.mxu0 %v139
  %v251 = vpop.f32.mrf.mxu0
  %v252 = vadd.f32 %v49, %v251
  %253 = vmatmul.f32.gmra.mxu0 %v142
  %v254 = vpop.f32.mrf.mxu0
  %v255 = vadd.f32 %v49, %v254
  %256 = vmatmul.f32.gmra.mxu0 %v145
  %v257 = vpop.f32.mrf.mxu0
  %v258 = vadd.f32 %v49, %v257
  %259 = vdwg.mxu0
  %v260 = vld [vmem:[%s0] sm:$0xff]
  %v261 = vld [vmem:[%s0 + $0x8] sm:$0xff]
  %v262 = vld [vmem:[%s0 + $0x10] sm:$0xff]
  %v263 = vld [vmem:[%s0 + $0x18] sm:$0xff]
  %v264 = vld [vmem:[%s0 + $0x20] sm:$0xff]
  %v265 = vld [vmem:[%s0 + $0x28] sm:$0xff]
  %v266 = vld [vmem:[%s0 + $0x30] sm:$0xff]
  %v267 = vld [vmem:[%s0 + $0x38] sm:$0xff]
  %v268 = vld [vmem:[%s0 + $0x40] sm:$0xff]
  %v269 = vld [vmem:[%s0 + $0x48] sm:$0xff]
  %v270 = vld [vmem:[%s0 + $0x50] sm:$0xff]
  %v271 = vld [vmem:[%s0 + $0x58] sm:$0xff]
  %v272 = vld [vmem:[%s0 + $0x60] sm:$0xff]
  %v273 = vld [vmem:[%s0 + $0x68] sm:$0xff]
  %v274 = vld [vmem:[%s0 + $0x70] sm:$0xff]
  %v275 = vld [vmem:[%s0 + $0x78] sm:$0xff]
  %v276 = vld [vmem:[%s0 + $0x80] sm:$0xff]
  %v277 = vld [vmem:[%s0 + $0x88] sm:$0xff]
  %v278 = vld [vmem:[%s0 + $0x90] sm:$0xff]
  %v279 = vld [vmem:[%s0 + $0x98] sm:$0xff]
  %v280 = vld [vmem:[%s0 + $0xa0] sm:$0xff]
  %v281 = vld [vmem:[%s0 + $0xa8] sm:$0xff]
  %v282 = vld [vmem:[%s0 + $0xb0] sm:$0xff]
  %v283 = vld [vmem:[%s0 + $0xb8] sm:$0xff]
  %v284 = vld [vmem:[%s0 + $0xc0] sm:$0xff]
  %v285 = vld [vmem:[%s0 + $0xc8] sm:$0xff]
  %v286 = vld [vmem:[%s0 + $0xd0] sm:$0xff]
  %v287 = vld [vmem:[%s0 + $0xd8] sm:$0xff]
  %v288 = vld [vmem:[%s0 + $0xe0] sm:$0xff]
  %v289 = vld [vmem:[%s0 + $0xe8] sm:$0xff]
  %v290 = vld [vmem:[%s0 + $0xf0] sm:$0xff]
  %v291 = vld [vmem:[%s0 + $0xf8] sm:$0xff]
  %v292 = vpack.c.bf16 %v168, %v165
  %v293 = vpack.c.bf16 %v174, %v171
  %v294 = vpack.c.bf16 %v180, %v177
  %v295 = vpack.c.bf16 %v186, %v183
  %v296 = vpack.c.bf16 %v192, %v189
  %v297 = vpack.c.bf16 %v198, %v195
  %v298 = vpack.c.bf16 %v204, %v201
  %v299 = vpack.c.bf16 %v210, %v207
  %v300 = vpack.c.bf16 %v216, %v213
  %v301 = vpack.c.bf16 %v222, %v219
  %v302 = vpack.c.bf16 %v228, %v225
  %v303 = vpack.c.bf16 %v234, %v231
  %v304 = vpack.c.bf16 %v240, %v237
  %v305 = vpack.c.bf16 %v246, %v243
  %v306 = vpack.c.bf16 %v252, %v249
  %v307 = vpack.c.bf16 %v258, %v255
  %v340 = vunpack.c.l.b16 %v260
  %v341 = vunpack.c.h.b16 %v260
  %v342 = vunpack.c.l.b16 %v261
  %v343 = vunpack.c.h.b16 %v261
  %v344 = vunpack.c.l.b16 %v262
  %v345 = vunpack.c.h.b16 %v262
  %v346 = vunpack.c.l.b16 %v263
  %v347 = vunpack.c.h.b16 %v263
  %v348 = vunpack.c.l.b16 %v264
  %v349 = vunpack.c.h.b16 %v264
  %v350 = vunpack.c.l.b16 %v265
  %v351 = vunpack.c.h.b16 %v265
  %v352 = vunpack.c.l.b16 %v266
  %v353 = vunpack.c.h.b16 %v266
  %v354 = vunpack.c.l.b16 %v267
  %v355 = vunpack.c.h.b16 %v267
  %v356 = vunpack.c.l.b16 %v268
  %v357 = vunpack.c.h.b16 %v268
  %v358 = vunpack.c.l.b16 %v269
  %v359 = vunpack.c.h.b16 %v269
  %v360 = vunpack.c.l.b16 %v270
  %v361 = vunpack.c.h.b16 %v270
  %v362 = vunpack.c.l.b16 %v271
  %v363 = vunpack.c.h.b16 %v271
  %v364 = vunpack.c.l.b16 %v272
  %v365 = vunpack.c.h.b16 %v272
  %v366 = vunpack.c.l.b16 %v273
  %v367 = vunpack.c.h.b16 %v273
  %v368 = vunpack.c.l.b16 %v274
  %v369 = vunpack.c.h.b16 %v274
  %v370 = vunpack.c.l.b16 %v275
  %v371 = vunpack.c.h.b16 %v275
  %v372 = vunpack.c.l.b16 %v276
  %v373 = vunpack.c.h.b16 %v276
  %v374 = vunpack.c.l.b16 %v277
  %v375 = vunpack.c.h.b16 %v277
  %v376 = vunpack.c.l.b16 %v278
  %v377 = vunpack.c.h.b16 %v278
  %v378 = vunpack.c.l.b16 %v279
  %v379 = vunpack.c.h.b16 %v279
  %v380 = vunpack.c.l.b16 %v280
  %v381 = vunpack.c.h.b16 %v280
  %v382 = vunpack.c.l.b16 %v281
  %v383 = vunpack.c.h.b16 %v281
  %v384 = vunpack.c.l.b16 %v282
  %v385 = vunpack.c.h.b16 %v282
  %v386 = vunpack.c.l.b16 %v283
  %v387 = vunpack.c.h.b16 %v283
  %v388 = vunpack.c.l.b16 %v284
  %v389 = vunpack.c.h.b16 %v284
  %v390 = vunpack.c.l.b16 %v285
  %v391 = vunpack.c.h.b16 %v285
  %v392 = vunpack.c.l.b16 %v286
  %v393 = vunpack.c.h.b16 %v286
  %v394 = vunpack.c.l.b16 %v287
  %v395 = vunpack.c.h.b16 %v287
  %v396 = vunpack.c.l.b16 %v288
  %v397 = vunpack.c.h.b16 %v288
  %v398 = vunpack.c.l.b16 %v289
  %v399 = vunpack.c.h.b16 %v289
  %v400 = vunpack.c.l.b16 %v290
  %v401 = vunpack.c.h.b16 %v290
  %v402 = vunpack.c.l.b16 %v291
  %v403 = vunpack.c.h.b16 %v291
  %v404 = vpack.c.b16 %v342, %v340
  %v405 = vpack.c.b16 %v343, %v341
  %v406 = vpack.c.b16 %v346, %v344
  %v407 = vpack.c.b16 %v347, %v345
  %v408 = vpack.c.b16 %v350, %v348
  %v409 = vpack.c.b16 %v351, %v349
  %v410 = vpack.c.b16 %v354, %v352
  %v411 = vpack.c.b16 %v355, %v353
  %v412 = vpack.c.b16 %v358, %v356
  %v413 = vpack.c.b16 %v359, %v357
  %v414 = vpack.c.b16 %v362, %v360
  %v415 = vpack.c.b16 %v363, %v361
  %v416 = vpack.c.b16 %v366, %v364
  %v417 = vpack.c.b16 %v367, %v365
  %v418 = vpack.c.b16 %v370, %v368
  %v419 = vpack.c.b16 %v371, %v369
  %v420 = vpack.c.b16 %v374, %v372
  %v421 = vpack.c.b16 %v375, %v373
  %v422 = vpack.c.b16 %v378, %v376
  %v423 = vpack.c.b16 %v379, %v377
  %v424 = vpack.c.b16 %v382, %v380
  %v425 = vpack.c.b16 %v383, %v381
  %v426 = vpack.c.b16 %v386, %v384
  %v427 = vpack.c.b16 %v387, %v385
  %v428 = vpack.c.b16 %v390, %v388
  %v429 = vpack.c.b16 %v391, %v389
  %v430 = vpack.c.b16 %v394, %v392
  %v431 = vpack.c.b16 %v395, %v393
  %v432 = vpack.c.b16 %v398, %v396
  %v433 = vpack.c.b16 %v399, %v397
  %v434 = vpack.c.b16 %v402, %v400
  %v435 = vpack.c.b16 %v403, %v401
  %468 = vmatpush.bf16.msra.mxu0 %v299
  %469 = vmatpush.bf16.msra.mxu0 %v298
  %470 = vmatpush.bf16.msra.mxu0 %v297
  %471 = vmatpush.bf16.msra.mxu0 %v296
  %472 = vmatpush.bf16.msra.mxu0 %v295
  %473 = vmatpush.bf16.msra.mxu0 %v294
  %474 = vmatpush.bf16.msra.mxu0 %v293
  %475 = vmatpush.bf16.msra.mxu0 %v292
  %476 = vmatmul.bf16.gmra.mxu0 %v404
  %v477 = vpop.f32.mrf.mxu0
  %v478 = vadd.f32 0.0, %v477
  %v479 = vpop.f32.mrf.mxu0
  %v480 = vadd.f32 0.0, %v479
  %481 = vmatmul.bf16.gmra.mxu0 %v406
  %v482 = vpop.f32.mrf.mxu0
  %v483 = vadd.f32 0.0, %v482
  %v484 = vpop.f32.mrf.mxu0
  %v485 = vadd.f32 0.0, %v484
  %486 = vmatmul.bf16.gmra.mxu0 %v408
  %v487 = vpop.f32.mrf.mxu0
  %v488 = vadd.f32 0.0, %v487
  %v489 = vpop.f32.mrf.mxu0
  %v490 = vadd.f32 0.0, %v489
  %491 = vmatmul.bf16.gmra.mxu0 %v410
  %v492 = vpop.f32.mrf.mxu0
  %v493 = vadd.f32 0.0, %v492
  %v494 = vpop.f32.mrf.mxu0
  %v495 = vadd.f32 0.0, %v494
  %496 = vmatmul.bf16.gmra.mxu0 %v412
  %v497 = vpop.f32.mrf.mxu0
  %v498 = vadd.f32 0.0, %v497
  %v499 = vpop.f32.mrf.mxu0
  %v500 = vadd.f32 0.0, %v499
  %501 = vmatmul.bf16.gmra.mxu0 %v414
  %v502 = vpop.f32.mrf.mxu0
  %v503 = vadd.f32 0.0, %v502
  %v504 = vpop.f32.mrf.mxu0
  %v505 = vadd.f32 0.0, %v504
  %506 = vmatmul.bf16.gmra.mxu0 %v416
  %v507 = vpop.f32.mrf.mxu0
  %v508 = vadd.f32 0.0, %v507
  %v509 = vpop.f32.mrf.mxu0
  %v510 = vadd.f32 0.0, %v509
  %511 = vmatmul.bf16.gmra.mxu0 %v418
  %v512 = vpop.f32.mrf.mxu0
  %v513 = vadd.f32 0.0, %v512
  %v514 = vpop.f32.mrf.mxu0
  %v515 = vadd.f32 0.0, %v514
  %516 = vmatmul.bf16.gmra.mxu0 %v420
  %v517 = vpop.f32.mrf.mxu0
  %v518 = vadd.f32 0.0, %v517
  %v519 = vpop.f32.mrf.mxu0
  %v520 = vadd.f32 0.0, %v519
  %521 = vmatmul.bf16.gmra.mxu0 %v422
  %v522 = vpop.f32.mrf.mxu0
  %v523 = vadd.f32 0.0, %v522
  %v524 = vpop.f32.mrf.mxu0
  %v525 = vadd.f32 0.0, %v524
  %526 = vmatmul.bf16.gmra.mxu0 %v424
  %v527 = vpop.f32.mrf.mxu0
  %v528 = vadd.f32 0.0, %v527
  %v529 = vpop.f32.mrf.mxu0
  %v530 = vadd.f32 0.0, %v529
  %531 = vmatmul.bf16.gmra.mxu0 %v426
  %v532 = vpop.f32.mrf.mxu0
  %v533 = vadd.f32 0.0, %v532
  %v534 = vpop.f32.mrf.mxu0
  %v535 = vadd.f32 0.0, %v534
  %536 = vmatmul.bf16.gmra.mxu0 %v428
  %v537 = vpop.f32.mrf.mxu0
  %v538 = vadd.f32 0.0, %v537
  %v539 = vpop.f32.mrf.mxu0
  %v540 = vadd.f32 0.0, %v539
  %541 = vmatmul.bf16.gmra.mxu0 %v430
  %v542 = vpop.f32.mrf.mxu0
  %v543 = vadd.f32 0.0, %v542
  %v544 = vpop.f32.mrf.mxu0
  %v545 = vadd.f32 0.0, %v544
  %546 = vmatmul.bf16.gmra.mxu0 %v432
  %v547 = vpop.f32.mrf.mxu0
  %v548 = vadd.f32 0.0, %v547
  %v549 = vpop.f32.mrf.mxu0
  %v550 = vadd.f32 0.0, %v549
  %551 = vmatmul.bf16.gmra.mxu0 %v434
  %v552 = vpop.f32.mrf.mxu0
  %v553 = vadd.f32 0.0, %v552
  %v554 = vpop.f32.mrf.mxu0
  %v555 = vadd.f32 0.0, %v554
  %556 = vdwg.mxu0
  %557 = vmatpush.bf16.msra.mxu0 %v307
  %558 = vmatpush.bf16.msra.mxu0 %v306
  %559 = vmatpush.bf16.msra.mxu0 %v305
  %560 = vmatpush.bf16.msra.mxu0 %v304
  %561 = vmatpush.bf16.msra.mxu0 %v303
  %562 = vmatpush.bf16.msra.mxu0 %v302
  %563 = vmatpush.bf16.msra.mxu0 %v301
  %564 = vmatpush.bf16.msra.mxu0 %v300
  %565 = vmatmul.bf16.gmra.mxu0 %v405
  %v566 = vpop.f32.mrf.mxu0
  %v567 = vadd.f32 %v478, %v566
  %v568 = vpop.f32.mrf.mxu0
  %v569 = vadd.f32 %v480, %v568
  %570 = vmatmul.bf16.gmra.mxu0 %v407
  %v571 = vpop.f32.mrf.mxu0
  %v572 = vadd.f32 %v483, %v571
  %v573 = vpop.f32.mrf.mxu0
  %v574 = vadd.f32 %v485, %v573
  %575 = vmatmul.bf16.gmra.mxu0 %v409
  %v576 = vpop.f32.mrf.mxu0
  %v577 = vadd.f32 %v488, %v576
  %v578 = vpop.f32.mrf.mxu0
  %v579 = vadd.f32 %v490, %v578
  %580 = vmatmul.bf16.gmra.mxu0 %v411
  %v581 = vpop.f32.mrf.mxu0
  %v582 = vadd.f32 %v493, %v581
  %v583 = vpop.f32.mrf.mxu0
  %v584 = vadd.f32 %v495, %v583
  %585 = vmatmul.bf16.gmra.mxu0 %v413
  %v586 = vpop.f32.mrf.mxu0
  %v587 = vadd.f32 %v498, %v586
  %v588 = vpop.f32.mrf.mxu0
  %v589 = vadd.f32 %v500, %v588
  %590 = vmatmul.bf16.gmra.mxu0 %v415
  %v591 = vpop.f32.mrf.mxu0
  %v592 = vadd.f32 %v503, %v591
  %v593 = vpop.f32.mrf.mxu0
  %v594 = vadd.f32 %v505, %v593
  %595 = vmatmul.bf16.gmra.mxu0 %v417
  %v596 = vpop.f32.mrf.mxu0
  %v597 = vadd.f32 %v508, %v596
  %v598 = vpop.f32.mrf.mxu0
  %v599 = vadd.f32 %v510, %v598
  %600 = vmatmul.bf16.gmra.mxu0 %v419
  %v601 = vpop.f32.mrf.mxu0
  %v602 = vadd.f32 %v513, %v601
  %v603 = vpop.f32.mrf.mxu0
  %v604 = vadd.f32 %v515, %v603
  %605 = vmatmul.bf16.gmra.mxu0 %v421
  %v606 = vpop.f32.mrf.mxu0
  %v607 = vadd.f32 %v518, %v606
  %v608 = vpop.f32.mrf.mxu0
  %v609 = vadd.f32 %v520, %v608
  %610 = vmatmul.bf16.gmra.mxu0 %v423
  %v611 = vpop.f32.mrf.mxu0
  %v612 = vadd.f32 %v523, %v611
  %v613 = vpop.f32.mrf.mxu0
  %v614 = vadd.f32 %v525, %v613
  %615 = vmatmul.bf16.gmra.mxu0 %v425
  %v616 = vpop.f32.mrf.mxu0
  %v617 = vadd.f32 %v528, %v616
  %v618 = vpop.f32.mrf.mxu0
  %v619 = vadd.f32 %v530, %v618
  %620 = vmatmul.bf16.gmra.mxu0 %v427
  %v621 = vpop.f32.mrf.mxu0
  %v622 = vadd.f32 %v533, %v621
  %v623 = vpop.f32.mrf.mxu0
  %v624 = vadd.f32 %v535, %v623
  %625 = vmatmul.bf16.gmra.mxu0 %v429
  %v626 = vpop.f32.mrf.mxu0
  %v627 = vadd.f32 %v538, %v626
  %v628 = vpop.f32.mrf.mxu0
  %v629 = vadd.f32 %v540, %v628
  %630 = vmatmul.bf16.gmra.mxu0 %v431
  %v631 = vpop.f32.mrf.mxu0
  %v632 = vadd.f32 %v543, %v631
  %v633 = vpop.f32.mrf.mxu0
  %v634 = vadd.f32 %v545, %v633
  %635 = vmatmul.bf16.gmra.mxu0 %v433
  %v636 = vpop.f32.mrf.mxu0
  %v637 = vadd.f32 %v548, %v636
  %v638 = vpop.f32.mrf.mxu0
  %v639 = vadd.f32 %v550, %v638
  %640 = vmatmul.bf16.gmra.mxu0 %v435
  %v641 = vpop.f32.mrf.mxu0
  %v642 = vadd.f32 %v553, %v641
  %v643 = vpop.f32.mrf.mxu0
  %v644 = vadd.f32 %v555, %v643
  %645 = vdwg.mxu0
  %v646 = vmax.f32 %v567, 0.0
  %v647 = vmax.f32 %v569, 0.0
  %v648 = vmax.f32 %v572, 0.0
  %v649 = vmax.f32 %v574, 0.0
  %v650 = vmax.f32 %v577, 0.0
  %v651 = vmax.f32 %v579, 0.0
  %v652 = vmax.f32 %v582, 0.0
  %v653 = vmax.f32 %v584, 0.0
  %v654 = vmax.f32 %v587, 0.0
  %v655 = vmax.f32 %v589, 0.0
  %v656 = vmax.f32 %v592, 0.0
  %v657 = vmax.f32 %v594, 0.0
  %v658 = vmax.f32 %v597, 0.0
  %v659 = vmax.f32 %v599, 0.0
  %v660 = vmax.f32 %v602, 0.0
  %v661 = vmax.f32 %v604, 0.0
  %v662 = vmax.f32 %v607, 0.0
  %v663 = vmax.f32 %v609, 0.0
  %v664 = vmax.f32 %v612, 0.0
  %v665 = vmax.f32 %v614, 0.0
  %v666 = vmax.f32 %v617, 0.0
  %v667 = vmax.f32 %v619, 0.0
  %v668 = vmax.f32 %v622, 0.0
  %v669 = vmax.f32 %v624, 0.0
  %v670 = vmax.f32 %v627, 0.0
  %v671 = vmax.f32 %v629, 0.0
  %v672 = vmax.f32 %v632, 0.0
  %v673 = vmax.f32 %v634, 0.0
  %v674 = vmax.f32 %v637, 0.0
  %v675 = vmax.f32 %v639, 0.0
  %v676 = vmax.f32 %v642, 0.0
  %v677 = vmax.f32 %v644, 0.0
  %v678 = vld [vmem:[%s2 + $0x18] sm:$0xff]
  %v679 = vld [vmem:[%s2 + $0x20] sm:$0xff]
  %v680 = vld [vmem:[%s2 + $0x28] sm:$0xff]
  %v681 = vld [vmem:[%s2 + $0x30] sm:$0xff]
  %v682 = vld [vmem:[%s2 + $0x38] sm:$0x1]
  %v683 = vperm.slane %v682, 0
  %vm684 = vcmask 261120
  %v686 = vsel %vm684, %v646, 0
  %v689 = vsel %vm684, %v647, 0
  %v692 = vsel %vm684, %v648, 0
  %v695 = vsel %vm684, %v649, 0
  %v698 = vsel %vm684, %v650, 0
  %v701 = vsel %vm684, %v651, 0
  %v704 = vsel %vm684, %v652, 0
  %v707 = vsel %vm684, %v653, 0
  %v710 = vsel %vm684, %v654, 0
  %v713 = vsel %vm684, %v655, 0
  %v716 = vsel %vm684, %v656, 0
  %v719 = vsel %vm684, %v657, 0
  %v722 = vsel %vm684, %v658, 0
  %v725 = vsel %vm684, %v659, 0
  %v728 = vsel %vm684, %v660, 0
  %v731 = vsel %vm684, %v661, 0
  %v734 = vsel %vm684, %v662, 0
  %v737 = vsel %vm684, %v663, 0
  %v740 = vsel %vm684, %v664, 0
  %v743 = vsel %vm684, %v665, 0
  %v746 = vsel %vm684, %v666, 0
  %v749 = vsel %vm684, %v667, 0
  %v752 = vsel %vm684, %v668, 0
  %v755 = vsel %vm684, %v669, 0
  %v758 = vsel %vm684, %v670, 0
  %v761 = vsel %vm684, %v671, 0
  %v764 = vsel %vm684, %v672, 0
  %v767 = vsel %vm684, %v673, 0
  %v770 = vsel %vm684, %v674, 0
  %v773 = vsel %vm684, %v675, 0
  %v776 = vsel %vm684, %v676, 0
  %v779 = vsel %vm684, %v677, 0
  %781 = vmatpush.msra.mxu0 0.0
  %782 = vmatpush.msra.mxu0 0.0
  %783 = vmatpush.msra.mxu0 0.0
  %784 = vmatpush.msra.mxu0 0.0
  %785 = vmatpush.msra.mxu0 0.0
  %786 = vmatpush.msra.mxu0 0.0
  %787 = vmatpush.msra.mxu0 0.0
  %788 = vmatpush.msra.mxu0 0.0
  %789 = vmatpush.msra.mxu0 0.0
  %790 = vmatpush.msra.mxu0 0.0
  %791 = vmatpush.msra.mxu0 0.0
  %792 = vmatpush.msra.mxu0 0.0
  %793 = vmatpush.msra.mxu0 %v681
  %794 = vmatpush.msra.mxu0 %v680
  %795 = vmatpush.msra.mxu0 %v679
  %796 = vmatpush.msra.mxu0 %v678
  %797 = vmatmul.f32.gmra.mxu0 %v686
  %v798 = vpop.f32.mrf.mxu0
  %v799 = vadd.f32 %v683, %v798
  %800 = vmatmul.f32.gmra.mxu0 %v689
  %v801 = vpop.f32.mrf.mxu0
  %v802 = vadd.f32 %v683, %v801
  %803 = vmatmul.f32.gmra.mxu0 %v692
  %v804 = vpop.f32.mrf.mxu0
  %v805 = vadd.f32 %v683, %v804
  %806 = vmatmul.f32.gmra.mxu0 %v695
  %v807 = vpop.f32.mrf.mxu0
  %v808 = vadd.f32 %v683, %v807
  %809 = vmatmul.f32.gmra.mxu0 %v698
  %v810 = vpop.f32.mrf.mxu0
  %v811 = vadd.f32 %v683, %v810
  %812 = vmatmul.f32.gmra.mxu0 %v701
  %v813 = vpop.f32.mrf.mxu0
  %v814 = vadd.f32 %v683, %v813
  %815 = vmatmul.f32.gmra.mxu0 %v704
  %v816 = vpop.f32.mrf.mxu0
  %v817 = vadd.f32 %v683, %v816
  %818 = vmatmul.f32.gmra.mxu0 %v707
  %v819 = vpop.f32.mrf.mxu0
  %v820 = vadd.f32 %v683, %v819
  %821 = vmatmul.f32.gmra.mxu0 %v710
  %v822 = vpop.f32.mrf.mxu0
  %v823 = vadd.f32 %v683, %v822
  %824 = vmatmul.f32.gmra.mxu0 %v713
  %v825 = vpop.f32.mrf.mxu0
  %v826 = vadd.f32 %v683, %v825
  %827 = vmatmul.f32.gmra.mxu0 %v716
  %v828 = vpop.f32.mrf.mxu0
  %v829 = vadd.f32 %v683, %v828
  %830 = vmatmul.f32.gmra.mxu0 %v719
  %v831 = vpop.f32.mrf.mxu0
  %v832 = vadd.f32 %v683, %v831
  %833 = vmatmul.f32.gmra.mxu0 %v722
  %v834 = vpop.f32.mrf.mxu0
  %v835 = vadd.f32 %v683, %v834
  %836 = vmatmul.f32.gmra.mxu0 %v725
  %v837 = vpop.f32.mrf.mxu0
  %v838 = vadd.f32 %v683, %v837
  %839 = vmatmul.f32.gmra.mxu0 %v728
  %v840 = vpop.f32.mrf.mxu0
  %v841 = vadd.f32 %v683, %v840
  %842 = vmatmul.f32.gmra.mxu0 %v731
  %v843 = vpop.f32.mrf.mxu0
  %v844 = vadd.f32 %v683, %v843
  %845 = vmatmul.f32.gmra.mxu0 %v734
  %v846 = vpop.f32.mrf.mxu0
  %v847 = vadd.f32 %v683, %v846
  %848 = vmatmul.f32.gmra.mxu0 %v737
  %v849 = vpop.f32.mrf.mxu0
  %v850 = vadd.f32 %v683, %v849
  %851 = vmatmul.f32.gmra.mxu0 %v740
  %v852 = vpop.f32.mrf.mxu0
  %v853 = vadd.f32 %v683, %v852
  %854 = vmatmul.f32.gmra.mxu0 %v743
  %v855 = vpop.f32.mrf.mxu0
  %v856 = vadd.f32 %v683, %v855
  %857 = vmatmul.f32.gmra.mxu0 %v746
  %v858 = vpop.f32.mrf.mxu0
  %v859 = vadd.f32 %v683, %v858
  %860 = vmatmul.f32.gmra.mxu0 %v749
  %v861 = vpop.f32.mrf.mxu0
  %v862 = vadd.f32 %v683, %v861
  %863 = vmatmul.f32.gmra.mxu0 %v752
  %v864 = vpop.f32.mrf.mxu0
  %v865 = vadd.f32 %v683, %v864
  %866 = vmatmul.f32.gmra.mxu0 %v755
  %v867 = vpop.f32.mrf.mxu0
  %v868 = vadd.f32 %v683, %v867
  %869 = vmatmul.f32.gmra.mxu0 %v758
  %v870 = vpop.f32.mrf.mxu0
  %v871 = vadd.f32 %v683, %v870
  %872 = vmatmul.f32.gmra.mxu0 %v761
  %v873 = vpop.f32.mrf.mxu0
  %v874 = vadd.f32 %v683, %v873
  %875 = vmatmul.f32.gmra.mxu0 %v764
  %v876 = vpop.f32.mrf.mxu0
  %v877 = vadd.f32 %v683, %v876
  %878 = vmatmul.f32.gmra.mxu0 %v767
  %v879 = vpop.f32.mrf.mxu0
  %v880 = vadd.f32 %v683, %v879
  %881 = vmatmul.f32.gmra.mxu0 %v770
  %v882 = vpop.f32.mrf.mxu0
  %v883 = vadd.f32 %v683, %v882
  %884 = vmatmul.f32.gmra.mxu0 %v773
  %v885 = vpop.f32.mrf.mxu0
  %v886 = vadd.f32 %v683, %v885
  %887 = vmatmul.f32.gmra.mxu0 %v776
  %v888 = vpop.f32.mrf.mxu0
  %v889 = vadd.f32 %v683, %v888
  %890 = vmatmul.f32.gmra.mxu0 %v779
  %v891 = vpop.f32.mrf.mxu0
  %v892 = vadd.f32 %v683, %v891
  %893 = vdwg.mxu0
  %v894 = vpack.c.bf16 %v802, %v799
  %v895 = vpack.c.bf16 %v808, %v805
  %v896 = vpack.c.bf16 %v814, %v811
  %v897 = vpack.c.bf16 %v820, %v817
  %v898 = vpack.c.bf16 %v826, %v823
  %v899 = vpack.c.bf16 %v832, %v829
  %v900 = vpack.c.bf16 %v838, %v835
  %v901 = vpack.c.bf16 %v844, %v841
  %v902 = vpack.c.bf16 %v850, %v847
  %v903 = vpack.c.bf16 %v856, %v853
  %v904 = vpack.c.bf16 %v862, %v859
  %v905 = vpack.c.bf16 %v868, %v865
  %v906 = vpack.c.bf16 %v874, %v871
  %v907 = vpack.c.bf16 %v880, %v877
  %v908 = vpack.c.bf16 %v886, %v883
  %v909 = vpack.c.bf16 %v892, %v889
  %910 = vmatpush.bf16.msra.mxu0 %v901
  %911 = vmatpush.bf16.msra.mxu0 %v900
  %912 = vmatpush.bf16.msra.mxu0 %v899
  %913 = vmatpush.bf16.msra.mxu0 %v898
  %914 = vmatpush.bf16.msra.mxu0 %v897
  %915 = vmatpush.bf16.msra.mxu0 %v896
  %916 = vmatpush.bf16.msra.mxu0 %v895
  %917 = vmatpush.bf16.msra.mxu0 %v894
  %918 = vmatmul.bf16.gmra.mxu0 %v404
  %v919 = vpop.f32.mrf.mxu0
  %v920 = vadd.f32 0.0, %v919
  %v921 = vpop.f32.mrf.mxu0
  %v922 = vadd.f32 0.0, %v921
  %923 = vmatmul.bf16.gmra.mxu0 %v406
  %v924 = vpop.f32.mrf.mxu0
  %v925 = vadd.f32 0.0, %v924
  %v926 = vpop.f32.mrf.mxu0
  %v927 = vadd.f32 0.0, %v926
  %928 = vmatmul.bf16.gmra.mxu0 %v408
  %v929 = vpop.f32.mrf.mxu0
  %v930 = vadd.f32 0.0, %v929
  %v931 = vpop.f32.mrf.mxu0
  %v932 = vadd.f32 0.0, %v931
  %933 = vmatmul.bf16.gmra.mxu0 %v410
  %v934 = vpop.f32.mrf.mxu0
  %v935 = vadd.f32 0.0, %v934
  %v936 = vpop.f32.mrf.mxu0
  %v937 = vadd.f32 0.0, %v936
  %938 = vmatmul.bf16.gmra.mxu0 %v412
  %v939 = vpop.f32.mrf.mxu0
  %v940 = vadd.f32 0.0, %v939
  %v941 = vpop.f32.mrf.mxu0
  %v942 = vadd.f32 0.0, %v941
  %943 = vmatmul.bf16.gmra.mxu0 %v414
  %v944 = vpop.f32.mrf.mxu0
  %v945 = vadd.f32 0.0, %v944
  %v946 = vpop.f32.mrf.mxu0
  %v947 = vadd.f32 0.0, %v946
  %948 = vmatmul.bf16.gmra.mxu0 %v416
  %v949 = vpop.f32.mrf.mxu0
  %v950 = vadd.f32 0.0, %v949
  %v951 = vpop.f32.mrf.mxu0
  %v952 = vadd.f32 0.0, %v951
  %953 = vmatmul.bf16.gmra.mxu0 %v418
  %v954 = vpop.f32.mrf.mxu0
  %v955 = vadd.f32 0.0, %v954
  %v956 = vpop.f32.mrf.mxu0
  %v957 = vadd.f32 0.0, %v956
  %958 = vmatmul.bf16.gmra.mxu0 %v420
  %v959 = vpop.f32.mrf.mxu0
  %v960 = vadd.f32 0.0, %v959
  %v961 = vpop.f32.mrf.mxu0
  %v962 = vadd.f32 0.0, %v961
  %963 = vmatmul.bf16.gmra.mxu0 %v422
  %v964 = vpop.f32.mrf.mxu0
  %v965 = vadd.f32 0.0, %v964
  %v966 = vpop.f32.mrf.mxu0
  %v967 = vadd.f32 0.0, %v966
  %968 = vmatmul.bf16.gmra.mxu0 %v424
  %v969 = vpop.f32.mrf.mxu0
  %v970 = vadd.f32 0.0, %v969
  %v971 = vpop.f32.mrf.mxu0
  %v972 = vadd.f32 0.0, %v971
  %973 = vmatmul.bf16.gmra.mxu0 %v426
  %v974 = vpop.f32.mrf.mxu0
  %v975 = vadd.f32 0.0, %v974
  %v976 = vpop.f32.mrf.mxu0
  %v977 = vadd.f32 0.0, %v976
  %978 = vmatmul.bf16.gmra.mxu0 %v428
  %v979 = vpop.f32.mrf.mxu0
  %v980 = vadd.f32 0.0, %v979
  %v981 = vpop.f32.mrf.mxu0
  %v982 = vadd.f32 0.0, %v981
  %983 = vmatmul.bf16.gmra.mxu0 %v430
  %v984 = vpop.f32.mrf.mxu0
  %v985 = vadd.f32 0.0, %v984
  %v986 = vpop.f32.mrf.mxu0
  %v987 = vadd.f32 0.0, %v986
  %988 = vmatmul.bf16.gmra.mxu0 %v432
  %v989 = vpop.f32.mrf.mxu0
  %v990 = vadd.f32 0.0, %v989
  %v991 = vpop.f32.mrf.mxu0
  %v992 = vadd.f32 0.0, %v991
  %993 = vmatmul.bf16.gmra.mxu0 %v434
  %v994 = vpop.f32.mrf.mxu0
  %v995 = vadd.f32 0.0, %v994
  %v996 = vpop.f32.mrf.mxu0
  %v997 = vadd.f32 0.0, %v996
  %998 = vdwg.mxu0
  %999 = vmatpush.bf16.msra.mxu0 %v909
  %1000 = vmatpush.bf16.msra.mxu0 %v908
  %1001 = vmatpush.bf16.msra.mxu0 %v907
  %1002 = vmatpush.bf16.msra.mxu0 %v906
  %1003 = vmatpush.bf16.msra.mxu0 %v905
  %1004 = vmatpush.bf16.msra.mxu0 %v904
  %1005 = vmatpush.bf16.msra.mxu0 %v903
  %1006 = vmatpush.bf16.msra.mxu0 %v902
  %1007 = vmatmul.bf16.gmra.mxu0 %v405
  %v1008 = vpop.f32.mrf.mxu0
  %v1009 = vadd.f32 %v920, %v1008
  %v1010 = vpop.f32.mrf.mxu0
  %v1011 = vadd.f32 %v922, %v1010
  %1012 = vmatmul.bf16.gmra.mxu0 %v407
  %v1013 = vpop.f32.mrf.mxu0
  %v1014 = vadd.f32 %v925, %v1013
  %v1015 = vpop.f32.mrf.mxu0
  %v1016 = vadd.f32 %v927, %v1015
  %1017 = vmatmul.bf16.gmra.mxu0 %v409
  %v1018 = vpop.f32.mrf.mxu0
  %v1019 = vadd.f32 %v930, %v1018
  %v1020 = vpop.f32.mrf.mxu0
  %v1021 = vadd.f32 %v932, %v1020
  %1022 = vmatmul.bf16.gmra.mxu0 %v411
  %v1023 = vpop.f32.mrf.mxu0
  %v1024 = vadd.f32 %v935, %v1023
  %v1025 = vpop.f32.mrf.mxu0
  %v1026 = vadd.f32 %v937, %v1025
  %1027 = vmatmul.bf16.gmra.mxu0 %v413
  %v1028 = vpop.f32.mrf.mxu0
  %v1029 = vadd.f32 %v940, %v1028
  %v1030 = vpop.f32.mrf.mxu0
  %v1031 = vadd.f32 %v942, %v1030
  %1032 = vmatmul.bf16.gmra.mxu0 %v415
  %v1033 = vpop.f32.mrf.mxu0
  %v1034 = vadd.f32 %v945, %v1033
  %v1035 = vpop.f32.mrf.mxu0
  %v1036 = vadd.f32 %v947, %v1035
  %1037 = vmatmul.bf16.gmra.mxu0 %v417
  %v1038 = vpop.f32.mrf.mxu0
  %v1039 = vadd.f32 %v950, %v1038
  %v1040 = vpop.f32.mrf.mxu0
  %v1041 = vadd.f32 %v952, %v1040
  %1042 = vmatmul.bf16.gmra.mxu0 %v419
  %v1043 = vpop.f32.mrf.mxu0
  %v1044 = vadd.f32 %v955, %v1043
  %v1045 = vpop.f32.mrf.mxu0
  %v1046 = vadd.f32 %v957, %v1045
  %1047 = vmatmul.bf16.gmra.mxu0 %v421
  %v1048 = vpop.f32.mrf.mxu0
  %v1049 = vadd.f32 %v960, %v1048
  %v1050 = vpop.f32.mrf.mxu0
  %v1051 = vadd.f32 %v962, %v1050
  %1052 = vmatmul.bf16.gmra.mxu0 %v423
  %v1053 = vpop.f32.mrf.mxu0
  %v1054 = vadd.f32 %v965, %v1053
  %v1055 = vpop.f32.mrf.mxu0
  %v1056 = vadd.f32 %v967, %v1055
  %1057 = vmatmul.bf16.gmra.mxu0 %v425
  %v1058 = vpop.f32.mrf.mxu0
  %v1059 = vadd.f32 %v970, %v1058
  %v1060 = vpop.f32.mrf.mxu0
  %v1061 = vadd.f32 %v972, %v1060
  %1062 = vmatmul.bf16.gmra.mxu0 %v427
  %v1063 = vpop.f32.mrf.mxu0
  %v1064 = vadd.f32 %v975, %v1063
  %v1065 = vpop.f32.mrf.mxu0
  %v1066 = vadd.f32 %v977, %v1065
  %1067 = vmatmul.bf16.gmra.mxu0 %v429
  %v1068 = vpop.f32.mrf.mxu0
  %v1069 = vadd.f32 %v980, %v1068
  %v1070 = vpop.f32.mrf.mxu0
  %v1071 = vadd.f32 %v982, %v1070
  %1072 = vmatmul.bf16.gmra.mxu0 %v431
  %v1073 = vpop.f32.mrf.mxu0
  %v1074 = vadd.f32 %v985, %v1073
  %v1075 = vpop.f32.mrf.mxu0
  %v1076 = vadd.f32 %v987, %v1075
  %1077 = vmatmul.bf16.gmra.mxu0 %v433
  %v1078 = vpop.f32.mrf.mxu0
  %v1079 = vadd.f32 %v990, %v1078
  %v1080 = vpop.f32.mrf.mxu0
  %v1081 = vadd.f32 %v992, %v1080
  %1082 = vmatmul.bf16.gmra.mxu0 %v435
  %v1083 = vpop.f32.mrf.mxu0
  %v1084 = vadd.f32 %v995, %v1083
  %v1085 = vpop.f32.mrf.mxu0
  %v1086 = vadd.f32 %v997, %v1085
  %1087 = vdwg.mxu0
  %v1088 = vmax.f32 %v1009, 0.0
  %v1089 = vmax.f32 %v1011, 0.0
  %v1090 = vmax.f32 %v1014, 0.0
  %v1091 = vmax.f32 %v1016, 0.0
  %v1092 = vmax.f32 %v1019, 0.0
  %v1093 = vmax.f32 %v1021, 0.0
  %v1094 = vmax.f32 %v1024, 0.0
  %v1095 = vmax.f32 %v1026, 0.0
  %v1096 = vmax.f32 %v1029, 0.0
  %v1097 = vmax.f32 %v1031, 0.0
  %v1098 = vmax.f32 %v1034, 0.0
  %v1099 = vmax.f32 %v1036, 0.0
  %v1100 = vmax.f32 %v1039, 0.0
  %v1101 = vmax.f32 %v1041, 0.0
  %v1102 = vmax.f32 %v1044, 0.0
  %v1103 = vmax.f32 %v1046, 0.0
  %v1104 = vmax.f32 %v1049, 0.0
  %v1105 = vmax.f32 %v1051, 0.0
  %v1106 = vmax.f32 %v1054, 0.0
  %v1107 = vmax.f32 %v1056, 0.0
  %v1108 = vmax.f32 %v1059, 0.0
  %v1109 = vmax.f32 %v1061, 0.0
  %v1110 = vmax.f32 %v1064, 0.0
  %v1111 = vmax.f32 %v1066, 0.0
  %v1112 = vmax.f32 %v1069, 0.0
  %v1113 = vmax.f32 %v1071, 0.0
  %v1114 = vmax.f32 %v1074, 0.0
  %v1115 = vmax.f32 %v1076, 0.0
  %v1116 = vmax.f32 %v1079, 0.0
  %v1117 = vmax.f32 %v1081, 0.0
  %v1118 = vmax.f32 %v1084, 0.0
  %v1119 = vmax.f32 %v1086, 0.0
  %v1120 = vld [vmem:[%s2 + $0x40] sm:$0xff]
  %v1121 = vld [vmem:[%s2 + $0x48] sm:$0xff]
  %v1122 = vld [vmem:[%s2 + $0x50] sm:$0xff]
  %v1123 = vld [vmem:[%s2 + $0x58] sm:$0xff]
  %v1124 = vld [vmem:[%s2 + $0x60] sm:$0x1]
  %v1125 = vperm.slane %v1124, 0
  %v1127 = vsel %vm684, %v1088, 0
  %v1130 = vsel %vm684, %v1089, 0
  %v1133 = vsel %vm684, %v1090, 0
  %v1136 = vsel %vm684, %v1091, 0
  %v1139 = vsel %vm684, %v1092, 0
  %v1142 = vsel %vm684, %v1093, 0
  %v1145 = vsel %vm684, %v1094, 0
  %v1148 = vsel %vm684, %v1095, 0
  %v1151 = vsel %vm684, %v1096, 0
  %v1154 = vsel %vm684, %v1097, 0
  %v1157 = vsel %vm684, %v1098, 0
  %v1160 = vsel %vm684, %v1099, 0
  %v1163 = vsel %vm684, %v1100, 0
  %v1166 = vsel %vm684, %v1101, 0
  %v1169 = vsel %vm684, %v1102, 0
  %v1172 = vsel %vm684, %v1103, 0
  %v1175 = vsel %vm684, %v1104, 0
  %v1178 = vsel %vm684, %v1105, 0
  %v1181 = vsel %vm684, %v1106, 0
  %v1184 = vsel %vm684, %v1107, 0
  %v1187 = vsel %vm684, %v1108, 0
  %v1190 = vsel %vm684, %v1109, 0
  %v1193 = vsel %vm684, %v1110, 0
  %v1196 = vsel %vm684, %v1111, 0
  %v1199 = vsel %vm684, %v1112, 0
  %v1202 = vsel %vm684, %v1113, 0
  %v1205 = vsel %vm684, %v1114, 0
  %v1208 = vsel %vm684, %v1115, 0
  %v1211 = vsel %vm684, %v1116, 0
  %v1214 = vsel %vm684, %v1117, 0
  %v1217 = vsel %vm684, %v1118, 0
  %v1220 = vsel %vm684, %v1119, 0
  %1222 = vmatpush.msra.mxu0 0.0
  %1223 = vmatpush.msra.mxu0 0.0
  %1224 = vmatpush.msra.mxu0 0.0
  %1225 = vmatpush.msra.mxu0 0.0
  %1226 = vmatpush.msra.mxu0 0.0
  %1227 = vmatpush.msra.mxu0 0.0
  %1228 = vmatpush.msra.mxu0 0.0
  %1229 = vmatpush.msra.mxu0 0.0
  %1230 = vmatpush.msra.mxu0 0.0
  %1231 = vmatpush.msra.mxu0 0.0
  %1232 = vmatpush.msra.mxu0 0.0
  %1233 = vmatpush.msra.mxu0 0.0
  %1234 = vmatpush.msra.mxu0 %v1123
  %1235 = vmatpush.msra.mxu0 %v1122
  %1236 = vmatpush.msra.mxu0 %v1121
  %1237 = vmatpush.msra.mxu0 %v1120
  %1238 = vmatmul.f32.gmra.mxu0 %v1127
  %v1239 = vpop.f32.mrf.mxu0
  %v1240 = vadd.f32 %v1125, %v1239
  %1241 = vmatmul.f32.gmra.mxu0 %v1130
  %v1242 = vpop.f32.mrf.mxu0
  %v1243 = vadd.f32 %v1125, %v1242
  %1244 = vmatmul.f32.gmra.mxu0 %v1133
  %v1245 = vpop.f32.mrf.mxu0
  %v1246 = vadd.f32 %v1125, %v1245
  %1247 = vmatmul.f32.gmra.mxu0 %v1136
  %v1248 = vpop.f32.mrf.mxu0
  %v1249 = vadd.f32 %v1125, %v1248
  %1250 = vmatmul.f32.gmra.mxu0 %v1139
  %v1251 = vpop.f32.mrf.mxu0
  %v1252 = vadd.f32 %v1125, %v1251
  %1253 = vmatmul.f32.gmra.mxu0 %v1142
  %v1254 = vpop.f32.mrf.mxu0
  %v1255 = vadd.f32 %v1125, %v1254
  %1256 = vmatmul.f32.gmra.mxu0 %v1145
  %v1257 = vpop.f32.mrf.mxu0
  %v1258 = vadd.f32 %v1125, %v1257
  %1259 = vmatmul.f32.gmra.mxu0 %v1148
  %v1260 = vpop.f32.mrf.mxu0
  %v1261 = vadd.f32 %v1125, %v1260
  %1262 = vmatmul.f32.gmra.mxu0 %v1151
  %v1263 = vpop.f32.mrf.mxu0
  %v1264 = vadd.f32 %v1125, %v1263
  %1265 = vmatmul.f32.gmra.mxu0 %v1154
  %v1266 = vpop.f32.mrf.mxu0
  %v1267 = vadd.f32 %v1125, %v1266
  %1268 = vmatmul.f32.gmra.mxu0 %v1157
  %v1269 = vpop.f32.mrf.mxu0
  %v1270 = vadd.f32 %v1125, %v1269
  %1271 = vmatmul.f32.gmra.mxu0 %v1160
  %v1272 = vpop.f32.mrf.mxu0
  %v1273 = vadd.f32 %v1125, %v1272
  %1274 = vmatmul.f32.gmra.mxu0 %v1163
  %v1275 = vpop.f32.mrf.mxu0
  %v1276 = vadd.f32 %v1125, %v1275
  %1277 = vmatmul.f32.gmra.mxu0 %v1166
  %v1278 = vpop.f32.mrf.mxu0
  %v1279 = vadd.f32 %v1125, %v1278
  %1280 = vmatmul.f32.gmra.mxu0 %v1169
  %v1281 = vpop.f32.mrf.mxu0
  %v1282 = vadd.f32 %v1125, %v1281
  %1283 = vmatmul.f32.gmra.mxu0 %v1172
  %v1284 = vpop.f32.mrf.mxu0
  %v1285 = vadd.f32 %v1125, %v1284
  %1286 = vmatmul.f32.gmra.mxu0 %v1175
  %v1287 = vpop.f32.mrf.mxu0
  %v1288 = vadd.f32 %v1125, %v1287
  %1289 = vmatmul.f32.gmra.mxu0 %v1178
  %v1290 = vpop.f32.mrf.mxu0
  %v1291 = vadd.f32 %v1125, %v1290
  %1292 = vmatmul.f32.gmra.mxu0 %v1181
  %v1293 = vpop.f32.mrf.mxu0
  %v1294 = vadd.f32 %v1125, %v1293
  %1295 = vmatmul.f32.gmra.mxu0 %v1184
  %v1296 = vpop.f32.mrf.mxu0
  %v1297 = vadd.f32 %v1125, %v1296
  %1298 = vmatmul.f32.gmra.mxu0 %v1187
  %v1299 = vpop.f32.mrf.mxu0
  %v1300 = vadd.f32 %v1125, %v1299
  %1301 = vmatmul.f32.gmra.mxu0 %v1190
  %v1302 = vpop.f32.mrf.mxu0
  %v1303 = vadd.f32 %v1125, %v1302
  %1304 = vmatmul.f32.gmra.mxu0 %v1193
  %v1305 = vpop.f32.mrf.mxu0
  %v1306 = vadd.f32 %v1125, %v1305
  %1307 = vmatmul.f32.gmra.mxu0 %v1196
  %v1308 = vpop.f32.mrf.mxu0
  %v1309 = vadd.f32 %v1125, %v1308
  %1310 = vmatmul.f32.gmra.mxu0 %v1199
  %v1311 = vpop.f32.mrf.mxu0
  %v1312 = vadd.f32 %v1125, %v1311
  %1313 = vmatmul.f32.gmra.mxu0 %v1202
  %v1314 = vpop.f32.mrf.mxu0
  %v1315 = vadd.f32 %v1125, %v1314
  %1316 = vmatmul.f32.gmra.mxu0 %v1205
  %v1317 = vpop.f32.mrf.mxu0
  %v1318 = vadd.f32 %v1125, %v1317
  %1319 = vmatmul.f32.gmra.mxu0 %v1208
  %v1320 = vpop.f32.mrf.mxu0
  %v1321 = vadd.f32 %v1125, %v1320
  %1322 = vmatmul.f32.gmra.mxu0 %v1211
  %v1323 = vpop.f32.mrf.mxu0
  %v1324 = vadd.f32 %v1125, %v1323
  %1325 = vmatmul.f32.gmra.mxu0 %v1214
  %v1326 = vpop.f32.mrf.mxu0
  %v1327 = vadd.f32 %v1125, %v1326
  %1328 = vmatmul.f32.gmra.mxu0 %v1217
  %v1329 = vpop.f32.mrf.mxu0
  %v1330 = vadd.f32 %v1125, %v1329
  %1331 = vmatmul.f32.gmra.mxu0 %v1220
  %v1332 = vpop.f32.mrf.mxu0
  %v1333 = vadd.f32 %v1125, %v1332
  %1334 = vdwg.mxu0
  %v1335 = vpack.c.bf16 %v1243, %v1240
  %v1336 = vpack.c.bf16 %v1249, %v1246
  %v1337 = vpack.c.bf16 %v1255, %v1252
  %v1338 = vpack.c.bf16 %v1261, %v1258
  %v1339 = vpack.c.bf16 %v1267, %v1264
  %v1340 = vpack.c.bf16 %v1273, %v1270
  %v1341 = vpack.c.bf16 %v1279, %v1276
  %v1342 = vpack.c.bf16 %v1285, %v1282
  %v1343 = vpack.c.bf16 %v1291, %v1288
  %v1344 = vpack.c.bf16 %v1297, %v1294
  %v1345 = vpack.c.bf16 %v1303, %v1300
  %v1346 = vpack.c.bf16 %v1309, %v1306
  %v1347 = vpack.c.bf16 %v1315, %v1312
  %v1348 = vpack.c.bf16 %v1321, %v1318
  %v1349 = vpack.c.bf16 %v1327, %v1324
  %v1350 = vpack.c.bf16 %v1333, %v1330
  %1351 = vmatpush.bf16.msra.mxu0 %v1342
  %1352 = vmatpush.bf16.msra.mxu0 %v1341
  %1353 = vmatpush.bf16.msra.mxu0 %v1340
  %1354 = vmatpush.bf16.msra.mxu0 %v1339
  %1355 = vmatpush.bf16.msra.mxu0 %v1338
  %1356 = vmatpush.bf16.msra.mxu0 %v1337
  %1357 = vmatpush.bf16.msra.mxu0 %v1336
  %1358 = vmatpush.bf16.msra.mxu0 %v1335
  %1359 = vmatmul.bf16.gmra.mxu0 %v404
  %v1360 = vpop.f32.mrf.mxu0
  %v1361 = vadd.f32 0.0, %v1360
  %v1362 = vpop.f32.mrf.mxu0
  %v1363 = vadd.f32 0.0, %v1362
  %1364 = vmatmul.bf16.gmra.mxu0 %v406
  %v1365 = vpop.f32.mrf.mxu0
  %v1366 = vadd.f32 0.0, %v1365
  %v1367 = vpop.f32.mrf.mxu0
  %v1368 = vadd.f32 0.0, %v1367
  %1369 = vmatmul.bf16.gmra.mxu0 %v408
  %v1370 = vpop.f32.mrf.mxu0
  %v1371 = vadd.f32 0.0, %v1370
  %v1372 = vpop.f32.mrf.mxu0
  %v1373 = vadd.f32 0.0, %v1372
  %1374 = vmatmul.bf16.gmra.mxu0 %v410
  %v1375 = vpop.f32.mrf.mxu0
  %v1376 = vadd.f32 0.0, %v1375
  %v1377 = vpop.f32.mrf.mxu0
  %v1378 = vadd.f32 0.0, %v1377
  %1379 = vmatmul.bf16.gmra.mxu0 %v412
  %v1380 = vpop.f32.mrf.mxu0
  %v1381 = vadd.f32 0.0, %v1380
  %v1382 = vpop.f32.mrf.mxu0
  %v1383 = vadd.f32 0.0, %v1382
  %1384 = vmatmul.bf16.gmra.mxu0 %v414
  %v1385 = vpop.f32.mrf.mxu0
  %v1386 = vadd.f32 0.0, %v1385
  %v1387 = vpop.f32.mrf.mxu0
  %v1388 = vadd.f32 0.0, %v1387
  %1389 = vmatmul.bf16.gmra.mxu0 %v416
  %v1390 = vpop.f32.mrf.mxu0
  %v1391 = vadd.f32 0.0, %v1390
  %v1392 = vpop.f32.mrf.mxu0
  %v1393 = vadd.f32 0.0, %v1392
  %1394 = vmatmul.bf16.gmra.mxu0 %v418
  %v1395 = vpop.f32.mrf.mxu0
  %v1396 = vadd.f32 0.0, %v1395
  %v1397 = vpop.f32.mrf.mxu0
  %v1398 = vadd.f32 0.0, %v1397
  %1399 = vmatmul.bf16.gmra.mxu0 %v420
  %v1400 = vpop.f32.mrf.mxu0
  %v1401 = vadd.f32 0.0, %v1400
  %v1402 = vpop.f32.mrf.mxu0
  %v1403 = vadd.f32 0.0, %v1402
  %1404 = vmatmul.bf16.gmra.mxu0 %v422
  %v1405 = vpop.f32.mrf.mxu0
  %v1406 = vadd.f32 0.0, %v1405
  %v1407 = vpop.f32.mrf.mxu0
  %v1408 = vadd.f32 0.0, %v1407
  %1409 = vmatmul.bf16.gmra.mxu0 %v424
  %v1410 = vpop.f32.mrf.mxu0
  %v1411 = vadd.f32 0.0, %v1410
  %v1412 = vpop.f32.mrf.mxu0
  %v1413 = vadd.f32 0.0, %v1412
  %1414 = vmatmul.bf16.gmra.mxu0 %v426
  %v1415 = vpop.f32.mrf.mxu0
  %v1416 = vadd.f32 0.0, %v1415
  %v1417 = vpop.f32.mrf.mxu0
  %v1418 = vadd.f32 0.0, %v1417
  %1419 = vmatmul.bf16.gmra.mxu0 %v428
  %v1420 = vpop.f32.mrf.mxu0
  %v1421 = vadd.f32 0.0, %v1420
  %v1422 = vpop.f32.mrf.mxu0
  %v1423 = vadd.f32 0.0, %v1422
  %1424 = vmatmul.bf16.gmra.mxu0 %v430
  %v1425 = vpop.f32.mrf.mxu0
  %v1426 = vadd.f32 0.0, %v1425
  %v1427 = vpop.f32.mrf.mxu0
  %v1428 = vadd.f32 0.0, %v1427
  %1429 = vmatmul.bf16.gmra.mxu0 %v432
  %v1430 = vpop.f32.mrf.mxu0
  %v1431 = vadd.f32 0.0, %v1430
  %v1432 = vpop.f32.mrf.mxu0
  %v1433 = vadd.f32 0.0, %v1432
  %1434 = vmatmul.bf16.gmra.mxu0 %v434
  %v1435 = vpop.f32.mrf.mxu0
  %v1436 = vadd.f32 0.0, %v1435
  %v1437 = vpop.f32.mrf.mxu0
  %v1438 = vadd.f32 0.0, %v1437
  %1439 = vdwg.mxu0
  %1440 = vmatpush.bf16.msra.mxu0 %v1350
  %1441 = vmatpush.bf16.msra.mxu0 %v1349
  %1442 = vmatpush.bf16.msra.mxu0 %v1348
  %1443 = vmatpush.bf16.msra.mxu0 %v1347
  %1444 = vmatpush.bf16.msra.mxu0 %v1346
  %1445 = vmatpush.bf16.msra.mxu0 %v1345
  %1446 = vmatpush.bf16.msra.mxu0 %v1344
  %1447 = vmatpush.bf16.msra.mxu0 %v1343
  %1448 = vmatmul.bf16.gmra.mxu0 %v405
  %v1449 = vpop.f32.mrf.mxu0
  %v1450 = vadd.f32 %v1361, %v1449
  %v1451 = vpop.f32.mrf.mxu0
  %v1452 = vadd.f32 %v1363, %v1451
  %1453 = vmatmul.bf16.gmra.mxu0 %v407
  %v1454 = vpop.f32.mrf.mxu0
  %v1455 = vadd.f32 %v1366, %v1454
  %v1456 = vpop.f32.mrf.mxu0
  %v1457 = vadd.f32 %v1368, %v1456
  %1458 = vmatmul.bf16.gmra.mxu0 %v409
  %v1459 = vpop.f32.mrf.mxu0
  %v1460 = vadd.f32 %v1371, %v1459
  %v1461 = vpop.f32.mrf.mxu0
  %v1462 = vadd.f32 %v1373, %v1461
  %1463 = vmatmul.bf16.gmra.mxu0 %v411
  %v1464 = vpop.f32.mrf.mxu0
  %v1465 = vadd.f32 %v1376, %v1464
  %v1466 = vpop.f32.mrf.mxu0
  %v1467 = vadd.f32 %v1378, %v1466
  %1468 = vmatmul.bf16.gmra.mxu0 %v413
  %v1469 = vpop.f32.mrf.mxu0
  %v1470 = vadd.f32 %v1381, %v1469
  %v1471 = vpop.f32.mrf.mxu0
  %v1472 = vadd.f32 %v1383, %v1471
  %1473 = vmatmul.bf16.gmra.mxu0 %v415
  %v1474 = vpop.f32.mrf.mxu0
  %v1475 = vadd.f32 %v1386, %v1474
  %v1476 = vpop.f32.mrf.mxu0
  %v1477 = vadd.f32 %v1388, %v1476
  %1478 = vmatmul.bf16.gmra.mxu0 %v417
  %v1479 = vpop.f32.mrf.mxu0
  %v1480 = vadd.f32 %v1391, %v1479
  %v1481 = vpop.f32.mrf.mxu0
  %v1482 = vadd.f32 %v1393, %v1481
  %1483 = vmatmul.bf16.gmra.mxu0 %v419
  %v1484 = vpop.f32.mrf.mxu0
  %v1485 = vadd.f32 %v1396, %v1484
  %v1486 = vpop.f32.mrf.mxu0
  %v1487 = vadd.f32 %v1398, %v1486
  %1488 = vmatmul.bf16.gmra.mxu0 %v421
  %v1489 = vpop.f32.mrf.mxu0
  %v1490 = vadd.f32 %v1401, %v1489
  %v1491 = vpop.f32.mrf.mxu0
  %v1492 = vadd.f32 %v1403, %v1491
  %1493 = vmatmul.bf16.gmra.mxu0 %v423
  %v1494 = vpop.f32.mrf.mxu0
  %v1495 = vadd.f32 %v1406, %v1494
  %v1496 = vpop.f32.mrf.mxu0
  %v1497 = vadd.f32 %v1408, %v1496
  %1498 = vmatmul.bf16.gmra.mxu0 %v425
  %v1499 = vpop.f32.mrf.mxu0
  %v1500 = vadd.f32 %v1411, %v1499
  %v1501 = vpop.f32.mrf.mxu0
  %v1502 = vadd.f32 %v1413, %v1501
  %1503 = vmatmul.bf16.gmra.mxu0 %v427
  %v1504 = vpop.f32.mrf.mxu0
  %v1505 = vadd.f32 %v1416, %v1504
  %v1506 = vpop.f32.mrf.mxu0
  %v1507 = vadd.f32 %v1418, %v1506
  %1508 = vmatmul.bf16.gmra.mxu0 %v429
  %v1509 = vpop.f32.mrf.mxu0
  %v1510 = vadd.f32 %v1421, %v1509
  %v1511 = vpop.f32.mrf.mxu0
  %v1512 = vadd.f32 %v1423, %v1511
  %1513 = vmatmul.bf16.gmra.mxu0 %v431
  %v1514 = vpop.f32.mrf.mxu0
  %v1515 = vadd.f32 %v1426, %v1514
  %v1516 = vpop.f32.mrf.mxu0
  %v1517 = vadd.f32 %v1428, %v1516
  %1518 = vmatmul.bf16.gmra.mxu0 %v433
  %v1519 = vpop.f32.mrf.mxu0
  %v1520 = vadd.f32 %v1431, %v1519
  %v1521 = vpop.f32.mrf.mxu0
  %v1522 = vadd.f32 %v1433, %v1521
  %1523 = vmatmul.bf16.gmra.mxu0 %v435
  %v1524 = vpop.f32.mrf.mxu0
  %v1525 = vadd.f32 %v1436, %v1524
  %v1526 = vpop.f32.mrf.mxu0
  %v1527 = vadd.f32 %v1438, %v1526
  %1528 = vdwg.mxu0
  %1529 = vst [vmem:[%s3] sm:$0xff] %v1450
  %1530 = vst [vmem:[%s3 + $0x8] sm:$0xff] %v1452
  %1531 = vst [vmem:[%s3 + $0x10] sm:$0xff] %v1455
  %1532 = vst [vmem:[%s3 + $0x18] sm:$0xff] %v1457
  %1533 = vst [vmem:[%s3 + $0x20] sm:$0xff] %v1460
  %1534 = vst [vmem:[%s3 + $0x28] sm:$0xff] %v1462
  %1535 = vst [vmem:[%s3 + $0x30] sm:$0xff] %v1465
  %1536 = vst [vmem:[%s3 + $0x38] sm:$0xff] %v1467
  %1537 = vst [vmem:[%s3 + $0x40] sm:$0xff] %v1470
  %1538 = vst [vmem:[%s3 + $0x48] sm:$0xff] %v1472
  %1539 = vst [vmem:[%s3 + $0x50] sm:$0xff] %v1475
  %1540 = vst [vmem:[%s3 + $0x58] sm:$0xff] %v1477
  %1541 = vst [vmem:[%s3 + $0x60] sm:$0xff] %v1480
  %1542 = vst [vmem:[%s3 + $0x68] sm:$0xff] %v1482
  %1543 = vst [vmem:[%s3 + $0x70] sm:$0xff] %v1485
  %1544 = vst [vmem:[%s3 + $0x78] sm:$0xff] %v1487
  %1545 = vst [vmem:[%s3 + $0x80] sm:$0xff] %v1490
  %1546 = vst [vmem:[%s3 + $0x88] sm:$0xff] %v1492
  %1547 = vst [vmem:[%s3 + $0x90] sm:$0xff] %v1495
  %1548 = vst [vmem:[%s3 + $0x98] sm:$0xff] %v1497
  %1549 = vst [vmem:[%s3 + $0xa0] sm:$0xff] %v1500
  %1550 = vst [vmem:[%s3 + $0xa8] sm:$0xff] %v1502
  %1551 = vst [vmem:[%s3 + $0xb0] sm:$0xff] %v1505
  %1552 = vst [vmem:[%s3 + $0xb8] sm:$0xff] %v1507
  %1553 = vst [vmem:[%s3 + $0xc0] sm:$0xff] %v1510
  %1554 = vst [vmem:[%s3 + $0xc8] sm:$0xff] %v1512
  %1555 = vst [vmem:[%s3 + $0xd0] sm:$0xff] %v1515
  %1556 = vst [vmem:[%s3 + $0xd8] sm:$0xff] %v1517
  %1557 = vst [vmem:[%s3 + $0xe0] sm:$0xff] %v1520
  %1558 = vst [vmem:[%s3 + $0xe8] sm:$0xff] %v1522
  %1559 = vst [vmem:[%s3 + $0xf0] sm:$0xff] %v1525
  %1560 = vst [vmem:[%s3 + $0xf8] sm:$0xff] %v1527
  // Predicated region
  $region14: #{forward.1} parent=0 // pred_check
    _
  $region15: #{forward.1} parent=0 // pred_check_branch
    %1562 = sbr.rel (0) target = $region17
  $region16: #{forward.1} parent=0 // pred_region
    _
  $region17: #{forward.1} parent=0 // pred_fallthru
    _
  // Predicated region
  $region18: #{forward.1} parent=0 // pred_check
    _
  $region19: #{forward.1} parent=0 // pred_check_branch
    %1564 = sbr.rel (0) target = $region21
  $region20: #{forward.1} parent=0 // pred_region
    _
  $region21: #{forward.1} parent=0 // pred_fallthru
    _

</llo_original>
